<compile_context>
chip_gen: v5e
topology: v5e:2x2
jax: 0.10.0
libtpu: 0.0.40
codegen_flags: <defaults>
</compile_context>

<pallas_src>
import jax
import jax.numpy as jnp
from jax.experimental import pallas as pl
from jax.experimental.pallas import tpu as pltpu  # noqa: F401

# ---------------- configuration (small, consistent with the module) -------------
IMAGE_SIZE = 16
PATCH_SIZE = 8
FREQ_PATCH_SIZE = 8
CHANNELS = 3
DIM = 32
DEPTH = 2
HEADS = 2
DIM_HEAD = 16
MLP_DIM = 64
NUM_CLASSES = 10
BATCH = 2

INNER = HEADS * DIM_HEAD
SCALE = DIM_HEAD ** (-0.5)
NP_TOK = (IMAGE_SIZE // PATCH_SIZE) ** 2            # number of patch tokens / image
NF_TOK = (IMAGE_SIZE // FREQ_PATCH_SIZE) ** 2       # number of freq tokens / image
NTOT = NP_TOK + NF_TOK
PATCH_DIM = CHANNELS * PATCH_SIZE * PATCH_SIZE
FREQ_PATCH_DIM = CHANNELS * 2 * FREQ_PATCH_SIZE * FREQ_PATCH_SIZE
LN_EPS = 1e-5
NEG_INF = -1e9


# ---------------- in-kernel helpers ---------------------------------------------
def _layernorm(x, gamma, beta, eps=LN_EPS):
    mu = jnp.mean(x, axis=-1, keepdims=True)
    var = jnp.mean((x - mu) ** 2, axis=-1, keepdims=True)
    return (x - mu) * jax.lax.rsqrt(var + eps) * gamma + beta


def _erf_approx(x):
    # Abramowitz & Stegun 7.1.26 rational approximation, |err| ~ 1.5e-7
    a1, a2, a3, a4, a5 = 0.254829592, -0.284496736, 1.421413741, -1.453152027, 1.061405429
    p = 0.3275911
    ax = jnp.abs(x)
    t = 1.0 / (1.0 + p * ax)
    poly = ((((a5 * t + a4) * t + a3) * t + a2) * t + a1) * t
    y = 1.0 - poly * jnp.exp(-ax * ax)
    return jnp.where(x >= 0, y, -y)


def _gelu_exact(x):
    # matches torch.nn.GELU() (erf-based, approximate='none')
    return 0.5 * x * (1.0 + _erf_approx(x * 0.7071067811865476))


# ---------------- the single fused Pallas kernel ---------------------------------
def vit_kernel(
    patch_ref, freq_ref,                     # (B*NP, PATCH_DIM), (B*NF, FREQ_PATCH_DIM)
    pe_ln1_ref, pe_w_ref, pe_post_ref,       # (2,PATCH_DIM), (PATCH_DIM,D), (3,D)
    fe_ln1_ref, fe_w_ref, fe_post_ref,       # (2,FREQ_PATCH_DIM), (FREQ_PATCH_DIM,D), (3,D)
    pos_ref, mask_ref,                       # (B*NTOT, D), (B*NTOT, B*NTOT)
    ln_ref,                                  # (DEPTH, 4, D): [attn_g, attn_b, ff_g, ff_b]
    wqkv_ref, wout_ref,                      # (DEPTH, D, 3*INNER), (DEPTH, INNER, D)
    w1_ref, b1_ref, w2_ref, b2_ref,          # (DEPTH,D,MLP), (DEPTH,1,MLP), (DEPTH,MLP,D), (DEPTH,1,D)
    norm_ref,                                # (2, D)
    pool_ref,                                # (B, B*NTOT)
    head_w_ref, head_b_ref,                  # (D, C), (1, C)
    out_ref,                                 # (B, C)
):
    def embed(x, ln1, w, post):
        # LayerNorm(in_dim) -> Linear(in_dim, D) -> LayerNorm(D)
        x = _layernorm(x, ln1[0:1, :], ln1[1:2, :])
        x = jnp.dot(x, w, preferred_element_type=jnp.float32) + post[0:1, :]
        return _layernorm(x, post[1:2, :], post[2:3, :])

    f_emb = embed(freq_ref[...], fe_ln1_ref[...], fe_w_ref[...], fe_post_ref[...])
    x_emb = embed(patch_ref[...], pe_ln1_ref[...], pe_w_ref[...], pe_post_ref[...])

    # Token rows: [all freq tokens (batch-major); all patch tokens (batch-major)].
    # Batch separation is handled by mask_ref / pool_ref built with the same order.
    tok = jnp.concatenate([f_emb, x_emb], axis=0) + pos_ref[...]     # (B*NTOT, D)
    mask = mask_ref[...]

    depth = ln_ref.shape[0]
    for d in range(depth):                       # unrolled (DEPTH is tiny)
        ln = ln_ref[d]                           # (4, D)
        wqkv = wqkv_ref[d]                       # (D, 3*INNER)
        wout = wout_ref[d]                       # (INNER, D)

        # ---- pre-LN multi-head self-attention + residual ----
        xn = _layernorm(tok, ln[0:1, :], ln[1:2, :])
        qkv = jnp.dot(xn, wqkv, preferred_element_type=jnp.float32)  # (BN, 3*INNER)
        acc = None
        for h in range(HEADS):
            q = qkv[:, h * DIM_HEAD:(h + 1) * DIM_HEAD]
            k = qkv[:, INNER + h * DIM_HEAD:INNER + (h + 1) * DIM_HEAD]
            v = qkv[:, 2 * INNER + h * DIM_HEAD:2 * INNER + (h + 1) * DIM_HEAD]
            dots = jax.lax.dot_general(
                q, k, (((1,), (1,)), ((), ())),
                preferred_element_type=jnp.float32) * SCALE + mask   # (BN, BN)
            dots = dots - jnp.max(dots, axis=-1, keepdims=True)
            e = jnp.exp(dots)
            p = e * pl.reciprocal(jnp.sum(e, axis=-1, keepdims=True), approx=True)
            ho = jnp.dot(p, v, preferred_element_type=jnp.float32)   # (BN, Dh)
            # accumulate per-head contribution of the output projection
            contrib = jnp.dot(ho, wout[h * DIM_HEAD:(h + 1) * DIM_HEAD, :],
                              preferred_element_type=jnp.float32)    # (BN, D)
            acc = contrib if acc is None else acc + contrib
        tok = acc + tok

        # ---- feed-forward + residual ----
        hn = _layernorm(tok, ln[2:3, :], ln[3:4, :])
        h1 = jnp.dot(hn, w1_ref[d], preferred_element_type=jnp.float32) + b1_ref[d]
        h1 = _gelu_exact(h1)
        h2 = jnp.dot(h1, w2_ref[d], preferred_element_type=jnp.float32) + b2_ref[d]
        tok = h2 + tok

    # ---- final LayerNorm -> mean pool over patch tokens -> classifier head ----
    xn = _layernorm(tok, norm_ref[0:1, :], norm_ref[1:2, :])
    pooled = jnp.dot(pool_ref[...], xn, preferred_element_type=jnp.float32)   # (B, D)
    out_ref[...] = (jnp.dot(pooled, head_w_ref[...], preferred_element_type=jnp.float32)
                    + head_b_ref[...])


# ---------------- wrapper -----------------------------------------------------
def _build_constants(B):
    # Row ordering: [freq tokens of batch 0..B-1 ; patch tokens of batch 0..B-1]
    batch_ids = jnp.concatenate([
        jnp.repeat(jnp.arange(B), NF_TOK),
        jnp.repeat(jnp.arange(B), NP_TOK)], axis=0)                  # (B*NTOT,)
    same = batch_ids[:, None] == batch_ids[None, :]
    mask = jnp.where(same, 0.0, NEG_INF).astype(jnp.float32)         # (B*NTOT, B*NTOT)
    is_patch = jnp.concatenate([jnp.zeros((B * NF_TOK,), dtype=bool),
                                jnp.ones((B * NP_TOK,), dtype=bool)])
    sel = (batch_ids[None, :] == jnp.arange(B)[:, None]) & is_patch[None, :]
    pool = jnp.where(sel, 1.0 / NP_TOK, 0.0).astype(jnp.float32)     # (B, B*NTOT)
    return mask, pool


def run_fused(patch_tok, freq_tok, params):
    B = patch_tok.shape[0] // NP_TOK
    mask, pool = _build_constants(B)
    pos_all = jnp.concatenate([jnp.tile(params["freq_pos"], (B, 1)),
                               jnp.tile(params["pos"], (B, 1))], axis=0)  # (B*NTOT, D)
    return pl.pallas_call(
        vit_kernel,
        out_shape=jax.ShapeDtypeStruct((B, NUM_CLASSES), jnp.float32),
    )(patch_tok, freq_tok,
      params["pe_ln1"], params["pe_w"], params["pe_post"],
      params["fe_ln1"], params["fe_w"], params["fe_post"],
      pos_all, mask,
      params["ln"], params["wqkv"], params["wout"],
      params["w1"], params["b1"], params["w2"], params["b2"],
      params["norm"], pool,
      params["head_w"], params["head_b"])


# ---------------- plain-JAX glue --------------------------------------------------
def posemb_sincos_2d(h, w, dim, temperature=10000.0):
    y, x = jnp.meshgrid(jnp.arange(h), jnp.arange(w), indexing="ij")
    assert dim % 4 == 0
    omega = jnp.arange(dim // 4) / (dim // 4 - 1)
    omega = 1.0 / (temperature ** omega)
    y = y.flatten()[:, None] * omega[None, :]
    x = x.flatten()[:, None] * omega[None, :]
    pe = jnp.concatenate([jnp.sin(x), jnp.cos(x), jnp.sin(y), jnp.cos(y)], axis=1)
    return pe.astype(jnp.float32)


def patchify(img, p):
    # 'b c (h p1) (w p2) -> b (h w) (p1 p2 c)'
    B, C, H, W = img.shape
    hN, wN = H // p, W // p
    x = img.reshape(B, C, hN, p, wN, p)
    x = jnp.transpose(x, (0, 2, 4, 3, 5, 1))
    return x.reshape(B, hN * wN, p * p * C)


def freq_patchify(freqs, p):
    # 'b c (h p1) (w p2) ri -> b (h w) (p1 p2 ri c)'
    B, C, H, W, R = freqs.shape
    hN, wN = H // p, W // p
    x = freqs.reshape(B, C, hN, p, wN, p, R)
    x = jnp.transpose(x, (0, 2, 4, 3, 5, 6, 1))
    return x.reshape(B, hN * wN, p * p * R * C)


def init_params(key):
    keys = jax.random.split(key, 4 + DEPTH)

    def w_init(k, shape):
        return (0.02 * jax.random.normal(k, shape, jnp.float32)).astype(jnp.float32)

    p = {}
    # patch embedding: [LN gamma; LN beta], linear weight, [linear bias; LN gamma; LN beta]
    p["pe_ln1"] = jnp.concatenate([jnp.ones((1, PATCH_DIM)), jnp.zeros((1, PATCH_DIM))], 0).astype(jnp.float32)
    p["pe_w"] = w_init(keys[0], (PATCH_DIM, DIM))
    p["pe_post"] = jnp.concatenate([jnp.zeros((1, DIM)), jnp.ones((1, DIM)), jnp.zeros((1, DIM))], 0).astype(jnp.float32)
    # freq embedding
    p["fe_ln1"] = jnp.concatenate([jnp.ones((1, FREQ_PATCH_DIM)), jnp.zeros((1, FREQ_PATCH_DIM))], 0).astype(jnp.float32)
    p["fe_w"] = w_init(keys[1], (FREQ_PATCH_DIM, DIM))
    p["fe_post"] = jnp.concatenate([jnp.zeros((1, DIM)), jnp.ones((1, DIM)), jnp.zeros((1, DIM))], 0).astype(jnp.float32)

    # transformer layers, stacked along DEPTH
    ln_one = jnp.stack([jnp.ones((DIM,)), jnp.zeros((DIM,)),
                        jnp.ones((DIM,)), jnp.zeros((DIM,))], axis=0)     # (4, D)
    p["ln"] = jnp.tile(ln_one[None], (DEPTH, 1, 1)).astype(jnp.float32)
    wqkv, wout, w1, b1, w2, b2 = [], [], [], [], [], []
    for d in range(DEPTH):
        k0, k1, k2, k3 = jax.random.split(keys[2 + d], 4)
        wqkv.append(w_init(k0, (DIM, 3 * INNER)))
        wout.append(w_init(k1, (INNER, DIM)))
        w1.append(w_init(k2, (DIM, MLP_DIM)))
        b1.append(jnp.zeros((1, MLP_DIM), jnp.float32))
        w2.append(w_init(k3, (MLP_DIM, DIM)))
        b2.append(jnp.zeros((1, DIM), jnp.float32))
    p["wqkv"] = jnp.stack(wqkv)
    p["wout"] = jnp.stack(wout)
    p["w1"] = jnp.stack(w1)
    p["b1"] = jnp.stack(b1)
    p["w2"] = jnp.stack(w2)
    p["b2"] = jnp.stack(b2)

    # final norm + head
    p["norm"] = jnp.concatenate([jnp.ones((1, DIM)), jnp.zeros((1, DIM))], 0).astype(jnp.float32)
    p["head_w"] = w_init(keys[-1], (DIM, NUM_CLASSES))
    p["head_b"] = jnp.zeros((1, NUM_CLASSES), jnp.float32)

    # positional embeddings
    p["pos"] = posemb_sincos_2d(IMAGE_SIZE // PATCH_SIZE, IMAGE_SIZE // PATCH_SIZE, DIM)
    p["freq_pos"] = posemb_sincos_2d(IMAGE_SIZE // FREQ_PATCH_SIZE, IMAGE_SIZE // FREQ_PATCH_SIZE, DIM)
    return p


def simple_vit_forward(params, img):
    B = img.shape[0]
    # patch tokens, batch folded into rows
    patch_tok = patchify(img, PATCH_SIZE).reshape(B * NP_TOK, PATCH_DIM)
    # frequency tokens: torch.view_as_real(fft2(img))
    # TODO(synk): FFT has no Pallas equivalent; computed with jnp.fft.fft2 in plain JAX.
    freqs_c = jnp.fft.fft2(img.astype(jnp.complex64), axes=(-2, -1))
    freqs = jnp.stack([jnp.real(freqs_c), jnp.imag(freqs_c)], axis=-1)     # (B, C, H, W, 2)
    freq_tok = freq_patchify(freqs.astype(jnp.float32), FREQ_PATCH_SIZE).reshape(
        B * NF_TOK, FREQ_PATCH_DIM)
    return run_fused(patch_tok, freq_tok, params)                          # (B, NUM_CLASSES)


if __name__ == "__main__":
    key = jax.random.PRNGKey(0)
    k_img, k_params = jax.random.split(key)
    img = jax.random.normal(k_img, (BATCH, CHANNELS, IMAGE_SIZE, IMAGE_SIZE), jnp.float32)
    params = init_params(k_params)

    logits = jax.jit(simple_vit_forward)(params, img)
    logits = jax.block_until_ready(logits)
    assert logits.shape == (BATCH, NUM_CLASSES) and logits.dtype == jnp.float32
    assert bool(jnp.all(jnp.isfinite(logits)))
    print("KERNEL_OK")
</pallas_src>

<mosaic_0001>
module attributes {stable_mosaic.version = 11 : i64} {
  func.func @vit_kernel(%arg0: memref<8x192xf32, #tpu.memory_space<vmem>>, %arg1: memref<8x384xf32, #tpu.memory_space<vmem>>, %arg2: memref<2x192xf32, #tpu.memory_space<vmem>>, %arg3: memref<192x32xf32, #tpu.memory_space<vmem>>, %arg4: memref<3x32xf32, #tpu.memory_space<vmem>>, %arg5: memref<2x384xf32, #tpu.memory_space<vmem>>, %arg6: memref<384x32xf32, #tpu.memory_space<vmem>>, %arg7: memref<3x32xf32, #tpu.memory_space<vmem>>, %arg8: memref<16x32xf32, #tpu.memory_space<vmem>>, %arg9: memref<16x16xf32, #tpu.memory_space<vmem>>, %arg10: memref<2x4x32xf32, #tpu.memory_space<vmem>>, %arg11: memref<2x32x96xf32, #tpu.memory_space<vmem>>, %arg12: memref<2x32x32xf32, #tpu.memory_space<vmem>>, %arg13: memref<2x32x64xf32, #tpu.memory_space<vmem>>, %arg14: memref<2x1x64xf32, #tpu.memory_space<vmem>>, %arg15: memref<2x64x32xf32, #tpu.memory_space<vmem>>, %arg16: memref<2x1x32xf32, #tpu.memory_space<vmem>>, %arg17: memref<2x32xf32, #tpu.memory_space<vmem>>, %arg18: memref<2x16xf32, #tpu.memory_space<vmem>>, %arg19: memref<32x10xf32, #tpu.memory_space<vmem>>, %arg20: memref<1x10xf32, #tpu.memory_space<vmem>>, %arg21: memref<2x10xf32, #tpu.memory_space<vmem>>) attributes {dimension_semantics = [], scalar_prefetch = 0 : i64, scratch_operands = 0 : i64, tpu.core_type = #tpu.core_type<tc>} {
    %c0 = arith.constant 0 : index
    %c0_0 = arith.constant 0 : index
    %0 = vector.load %arg1[%c0, %c0_0] : memref<8x384xf32, #tpu.memory_space<vmem>>, vector<8x384xf32>
    %c0_1 = arith.constant 0 : index
    %c0_2 = arith.constant 0 : index
    %1 = vector.load %arg5[%c0_1, %c0_2] : memref<2x384xf32, #tpu.memory_space<vmem>>, vector<2x384xf32>
    %c0_3 = arith.constant 0 : index
    %c0_4 = arith.constant 0 : index
    %2 = vector.load %arg6[%c0_3, %c0_4] : memref<384x32xf32, #tpu.memory_space<vmem>>, vector<384x32xf32>
    %c0_5 = arith.constant 0 : index
    %c0_6 = arith.constant 0 : index
    %3 = vector.load %arg7[%c0_5, %c0_6] : memref<3x32xf32, #tpu.memory_space<vmem>>, vector<3x32xf32>
    %4 = vector.extract_strided_slice %1 {offsets = [0, 0], sizes = [1, 384], strides = [1, 1]} : vector<2x384xf32> to vector<1x384xf32>
    %5 = vector.extract_strided_slice %1 {offsets = [1, 0], sizes = [1, 384], strides = [1, 1]} : vector<2x384xf32> to vector<1x384xf32>
    %cst = arith.constant dense<0.000000e+00> : vector<8xf32>
    %6 = vector.multi_reduction <add>, %0, %cst [1] : vector<8x384xf32> to vector<8xf32>
    %7 = vector.shape_cast %6 : vector<8xf32> to vector<8x1xf32>
    %cst_7 = arith.constant 3.840000e+02 : f32
    %8 = vector.broadcast %cst_7 : f32 to vector<8x1xf32>
    %9 = arith.divf %7, %8 : vector<8x1xf32>
    %10 = vector.broadcast %9 : vector<8x1xf32> to vector<8x384xf32>
    %11 = arith.subf %0, %10 : vector<8x384xf32>
    %12 = arith.mulf %11, %11 : vector<8x384xf32>
    %cst_8 = arith.constant dense<0.000000e+00> : vector<8xf32>
    %13 = vector.multi_reduction <add>, %12, %cst_8 [1] : vector<8x384xf32> to vector<8xf32>
    %14 = vector.shape_cast %13 : vector<8xf32> to vector<8x1xf32>
    %cst_9 = arith.constant 3.840000e+02 : f32
    %15 = vector.broadcast %cst_9 : f32 to vector<8x1xf32>
    %16 = arith.divf %14, %15 : vector<8x1xf32>
    %17 = vector.broadcast %9 : vector<8x1xf32> to vector<8x384xf32>
    %18 = arith.subf %0, %17 : vector<8x384xf32>
    %cst_10 = arith.constant 9.99999974E-6 : f32
    %19 = vector.broadcast %cst_10 : f32 to vector<8x1xf32>
    %20 = arith.addf %16, %19 : vector<8x1xf32>
    %21 = math.rsqrt %20 : vector<8x1xf32>
    %22 = vector.broadcast %21 : vector<8x1xf32> to vector<8x384xf32>
    %23 = arith.mulf %18, %22 : vector<8x384xf32>
    %24 = vector.broadcast %4 : vector<1x384xf32> to vector<8x384xf32>
    %25 = arith.mulf %23, %24 : vector<8x384xf32>
    %26 = vector.broadcast %5 : vector<1x384xf32> to vector<8x384xf32>
    %27 = arith.addf %25, %26 : vector<8x384xf32>
    %cst_11 = arith.constant dense<0.000000e+00> : vector<8x32xf32>
    %28 = tpu.matmul %27, %2, %cst_11 {dimension_numbers = #tpu.dot_dimension_numbers<[1], [0], [0], [1], [0, 0, 1, 1], [], []>} : vector<8x384xf32>, vector<384x32xf32>, vector<8x32xf32> -> vector<8x32xf32>
    %29 = vector.extract_strided_slice %3 {offsets = [0, 0], sizes = [1, 32], strides = [1, 1]} : vector<3x32xf32> to vector<1x32xf32>
    %30 = vector.broadcast %29 : vector<1x32xf32> to vector<8x32xf32>
    %31 = arith.addf %28, %30 : vector<8x32xf32>
    %32 = vector.extract_strided_slice %3 {offsets = [1, 0], sizes = [1, 32], strides = [1, 1]} : vector<3x32xf32> to vector<1x32xf32>
    %33 = vector.extract_strided_slice %3 {offsets = [2, 0], sizes = [1, 32], strides = [1, 1]} : vector<3x32xf32> to vector<1x32xf32>
    %cst_12 = arith.constant dense<0.000000e+00> : vector<8xf32>
    %34 = vector.multi_reduction <add>, %31, %cst_12 [1] : vector<8x32xf32> to vector<8xf32>
    %35 = vector.shape_cast %34 : vector<8xf32> to vector<8x1xf32>
    %cst_13 = arith.constant 3.200000e+01 : f32
    %36 = vector.broadcast %cst_13 : f32 to vector<8x1xf32>
    %37 = arith.divf %35, %36 : vector<8x1xf32>
    %38 = vector.broadcast %37 : vector<8x1xf32> to vector<8x32xf32>
    %39 = arith.subf %31, %38 : vector<8x32xf32>
    %40 = arith.mulf %39, %39 : vector<8x32xf32>
    %cst_14 = arith.constant dense<0.000000e+00> : vector<8xf32>
    %41 = vector.multi_reduction <add>, %40, %cst_14 [1] : vector<8x32xf32> to vector<8xf32>
    %42 = vector.shape_cast %41 : vector<8xf32> to vector<8x1xf32>
    %cst_15 = arith.constant 3.200000e+01 : f32
    %43 = vector.broadcast %cst_15 : f32 to vector<8x1xf32>
    %44 = arith.divf %42, %43 : vector<8x1xf32>
    %45 = vector.broadcast %37 : vector<8x1xf32> to vector<8x32xf32>
    %46 = arith.subf %31, %45 : vector<8x32xf32>
    %cst_16 = arith.constant 9.99999974E-6 : f32
    %47 = vector.broadcast %cst_16 : f32 to vector<8x1xf32>
    %48 = arith.addf %44, %47 : vector<8x1xf32>
    %49 = math.rsqrt %48 : vector<8x1xf32>
    %50 = vector.broadcast %49 : vector<8x1xf32> to vector<8x32xf32>
    %51 = arith.mulf %46, %50 : vector<8x32xf32>
    %52 = vector.broadcast %32 : vector<1x32xf32> to vector<8x32xf32>
    %53 = arith.mulf %51, %52 : vector<8x32xf32>
    %54 = vector.broadcast %33 : vector<1x32xf32> to vector<8x32xf32>
    %55 = arith.addf %53, %54 : vector<8x32xf32>
    %c0_17 = arith.constant 0 : index
    %c0_18 = arith.constant 0 : index
    %56 = vector.load %arg0[%c0_17, %c0_18] : memref<8x192xf32, #tpu.memory_space<vmem>>, vector<8x192xf32>
    %c0_19 = arith.constant 0 : index
    %c0_20 = arith.constant 0 : index
    %57 = vector.load %arg2[%c0_19, %c0_20] : memref<2x192xf32, #tpu.memory_space<vmem>>, vector<2x192xf32>
    %c0_21 = arith.constant 0 : index
    %c0_22 = arith.constant 0 : index
    %58 = vector.load %arg3[%c0_21, %c0_22] : memref<192x32xf32, #tpu.memory_space<vmem>>, vector<192x32xf32>
    %c0_23 = arith.constant 0 : index
    %c0_24 = arith.constant 0 : index
    %59 = vector.load %arg4[%c0_23, %c0_24] : memref<3x32xf32, #tpu.memory_space<vmem>>, vector<3x32xf32>
    %60 = vector.extract_strided_slice %57 {offsets = [0, 0], sizes = [1, 192], strides = [1, 1]} : vector<2x192xf32> to vector<1x192xf32>
    %61 = vector.extract_strided_slice %57 {offsets = [1, 0], sizes = [1, 192], strides = [1, 1]} : vector<2x192xf32> to vector<1x192xf32>
    %cst_25 = arith.constant dense<0.000000e+00> : vector<8xf32>
    %62 = vector.multi_reduction <add>, %56, %cst_25 [1] : vector<8x192xf32> to vector<8xf32>
    %63 = vector.shape_cast %62 : vector<8xf32> to vector<8x1xf32>
    %cst_26 = arith.constant 1.920000e+02 : f32
    %64 = vector.broadcast %cst_26 : f32 to vector<8x1xf32>
    %65 = arith.divf %63, %64 : vector<8x1xf32>
    %66 = vector.broadcast %65 : vector<8x1xf32> to vector<8x192xf32>
    %67 = arith.subf %56, %66 : vector<8x192xf32>
    %68 = arith.mulf %67, %67 : vector<8x192xf32>
    %cst_27 = arith.constant dense<0.000000e+00> : vector<8xf32>
    %69 = vector.multi_reduction <add>, %68, %cst_27 [1] : vector<8x192xf32> to vector<8xf32>
    %70 = vector.shape_cast %69 : vector<8xf32> to vector<8x1xf32>
    %cst_28 = arith.constant 1.920000e+02 : f32
    %71 = vector.broadcast %cst_28 : f32 to vector<8x1xf32>
    %72 = arith.divf %70, %71 : vector<8x1xf32>
    %73 = vector.broadcast %65 : vector<8x1xf32> to vector<8x192xf32>
    %74 = arith.subf %56, %73 : vector<8x192xf32>
    %cst_29 = arith.constant 9.99999974E-6 : f32
    %75 = vector.broadcast %cst_29 : f32 to vector<8x1xf32>
    %76 = arith.addf %72, %75 : vector<8x1xf32>
    %77 = math.rsqrt %76 : vector<8x1xf32>
    %78 = vector.broadcast %77 : vector<8x1xf32> to vector<8x192xf32>
    %79 = arith.mulf %74, %78 : vector<8x192xf32>
    %80 = vector.broadcast %60 : vector<1x192xf32> to vector<8x192xf32>
    %81 = arith.mulf %79, %80 : vector<8x192xf32>
    %82 = vector.broadcast %61 : vector<1x192xf32> to vector<8x192xf32>
    %83 = arith.addf %81, %82 : vector<8x192xf32>
    %cst_30 = arith.constant dense<0.000000e+00> : vector<8x32xf32>
    %84 = tpu.matmul %83, %58, %cst_30 {dimension_numbers = #tpu.dot_dimension_numbers<[1], [0], [0], [1], [0, 0, 1, 1], [], []>} : vector<8x192xf32>, vector<192x32xf32>, vector<8x32xf32> -> vector<8x32xf32>
    %85 = vector.extract_strided_slice %59 {offsets = [0, 0], sizes = [1, 32], strides = [1, 1]} : vector<3x32xf32> to vector<1x32xf32>
    %86 = vector.broadcast %85 : vector<1x32xf32> to vector<8x32xf32>
    %87 = arith.addf %84, %86 : vector<8x32xf32>
    %88 = vector.extract_strided_slice %59 {offsets = [1, 0], sizes = [1, 32], strides = [1, 1]} : vector<3x32xf32> to vector<1x32xf32>
    %89 = vector.extract_strided_slice %59 {offsets = [2, 0], sizes = [1, 32], strides = [1, 1]} : vector<3x32xf32> to vector<1x32xf32>
    %cst_31 = arith.constant dense<0.000000e+00> : vector<8xf32>
    %90 = vector.multi_reduction <add>, %87, %cst_31 [1] : vector<8x32xf32> to vector<8xf32>
    %91 = vector.shape_cast %90 : vector<8xf32> to vector<8x1xf32>
    %cst_32 = arith.constant 3.200000e+01 : f32
    %92 = vector.broadcast %cst_32 : f32 to vector<8x1xf32>
    %93 = arith.divf %91, %92 : vector<8x1xf32>
    %94 = vector.broadcast %93 : vector<8x1xf32> to vector<8x32xf32>
    %95 = arith.subf %87, %94 : vector<8x32xf32>
    %96 = arith.mulf %95, %95 : vector<8x32xf32>
    %cst_33 = arith.constant dense<0.000000e+00> : vector<8xf32>
    %97 = vector.multi_reduction <add>, %96, %cst_33 [1] : vector<8x32xf32> to vector<8xf32>
    %98 = vector.shape_cast %97 : vector<8xf32> to vector<8x1xf32>
    %cst_34 = arith.constant 3.200000e+01 : f32
    %99 = vector.broadcast %cst_34 : f32 to vector<8x1xf32>
    %100 = arith.divf %98, %99 : vector<8x1xf32>
    %101 = vector.broadcast %93 : vector<8x1xf32> to vector<8x32xf32>
    %102 = arith.subf %87, %101 : vector<8x32xf32>
    %cst_35 = arith.constant 9.99999974E-6 : f32
    %103 = vector.broadcast %cst_35 : f32 to vector<8x1xf32>
    %104 = arith.addf %100, %103 : vector<8x1xf32>
    %105 = math.rsqrt %104 : vector<8x1xf32>
    %106 = vector.broadcast %105 : vector<8x1xf32> to vector<8x32xf32>
    %107 = arith.mulf %102, %106 : vector<8x32xf32>
    %108 = vector.broadcast %88 : vector<1x32xf32> to vector<8x32xf32>
    %109 = arith.mulf %107, %108 : vector<8x32xf32>
    %110 = vector.broadcast %89 : vector<1x32xf32> to vector<8x32xf32>
    %111 = arith.addf %109, %110 : vector<8x32xf32>
    %112 = tpu.concatenate %55, %111 in 0 : vector<8x32xf32>, vector<8x32xf32> -> vector<16x32xf32>
    %c0_36 = arith.constant 0 : index
    %c0_37 = arith.constant 0 : index
    %113 = vector.load %arg8[%c0_36, %c0_37] : memref<16x32xf32, #tpu.memory_space<vmem>>, vector<16x32xf32>
    %114 = arith.addf %112, %113 : vector<16x32xf32>
    %c0_38 = arith.constant 0 : index
    %c0_39 = arith.constant 0 : index
    %115 = vector.load %arg9[%c0_38, %c0_39] : memref<16x16xf32, #tpu.memory_space<vmem>>, vector<16x16xf32>
    %c0_40 = arith.constant 0 : index
    %c0_41 = arith.constant 0 : index
    %c0_42 = arith.constant 0 : index
    %116 = vector.load %arg10[%c0_40, %c0_41, %c0_42] : memref<2x4x32xf32, #tpu.memory_space<vmem>>, vector<1x4x32xf32>
    %117 = vector.shape_cast %116 : vector<1x4x32xf32> to vector<4x32xf32>
    %c0_43 = arith.constant 0 : index
    %c0_44 = arith.constant 0 : index
    %c0_45 = arith.constant 0 : index
    %118 = vector.load %arg11[%c0_43, %c0_44, %c0_45] : memref<2x32x96xf32, #tpu.memory_space<vmem>>, vector<1x32x96xf32>
    %119 = vector.shape_cast %118 : vector<1x32x96xf32> to vector<32x96xf32>
    %c0_46 = arith.constant 0 : index
    %c0_47 = arith.constant 0 : index
    %c0_48 = arith.constant 0 : index
    %120 = vector.load %arg12[%c0_46, %c0_47, %c0_48] : memref<2x32x32xf32, #tpu.memory_space<vmem>>, vector<1x32x32xf32>
    %121 = vector.shape_cast %120 : vector<1x32x32xf32> to vector<32x32xf32>
    %122 = vector.extract_strided_slice %117 {offsets = [0, 0], sizes = [1, 32], strides = [1, 1]} : vector<4x32xf32> to vector<1x32xf32>
    %123 = vector.extract_strided_slice %117 {offsets = [1, 0], sizes = [1, 32], strides = [1, 1]} : vector<4x32xf32> to vector<1x32xf32>
    %cst_49 = arith.constant dense<0.000000e+00> : vector<16xf32>
    %124 = vector.multi_reduction <add>, %114, %cst_49 [1] : vector<16x32xf32> to vector<16xf32>
    %125 = vector.shape_cast %124 : vector<16xf32> to vector<16x1xf32>
    %cst_50 = arith.constant 3.200000e+01 : f32
    %126 = vector.broadcast %cst_50 : f32 to vector<16x1xf32>
    %127 = arith.divf %125, %126 : vector<16x1xf32>
    %128 = vector.broadcast %127 : vector<16x1xf32> to vector<16x32xf32>
    %129 = arith.subf %114, %128 : vector<16x32xf32>
    %130 = arith.mulf %129, %129 : vector<16x32xf32>
    %cst_51 = arith.constant dense<0.000000e+00> : vector<16xf32>
    %131 = vector.multi_reduction <add>, %130, %cst_51 [1] : vector<16x32xf32> to vector<16xf32>
    %132 = vector.shape_cast %131 : vector<16xf32> to vector<16x1xf32>
    %cst_52 = arith.constant 3.200000e+01 : f32
    %133 = vector.broadcast %cst_52 : f32 to vector<16x1xf32>
    %134 = arith.divf %132, %133 : vector<16x1xf32>
    %135 = vector.broadcast %127 : vector<16x1xf32> to vector<16x32xf32>
    %136 = arith.subf %114, %135 : vector<16x32xf32>
    %cst_53 = arith.constant 9.99999974E-6 : f32
    %137 = vector.broadcast %cst_53 : f32 to vector<16x1xf32>
    %138 = arith.addf %134, %137 : vector<16x1xf32>
    %139 = math.rsqrt %138 : vector<16x1xf32>
    %140 = vector.broadcast %139 : vector<16x1xf32> to vector<16x32xf32>
    %141 = arith.mulf %136, %140 : vector<16x32xf32>
    %142 = vector.broadcast %122 : vector<1x32xf32> to vector<16x32xf32>
    %143 = arith.mulf %141, %142 : vector<16x32xf32>
    %144 = vector.broadcast %123 : vector<1x32xf32> to vector<16x32xf32>
    %145 = arith.addf %143, %144 : vector<16x32xf32>
    %cst_54 = arith.constant dense<0.000000e+00> : vector<16x96xf32>
    %146 = tpu.matmul %145, %119, %cst_54 {dimension_numbers = #tpu.dot_dimension_numbers<[1], [0], [0], [1], [0, 0, 1, 1], [], []>} : vector<16x32xf32>, vector<32x96xf32>, vector<16x96xf32> -> vector<16x96xf32>
    %147 = vector.extract_strided_slice %146 {offsets = [0, 0], sizes = [16, 16], strides = [1, 1]} : vector<16x96xf32> to vector<16x16xf32>
    %148 = vector.extract_strided_slice %146 {offsets = [0, 32], sizes = [16, 16], strides = [1, 1]} : vector<16x96xf32> to vector<16x16xf32>
    %149 = vector.extract_strided_slice %146 {offsets = [0, 64], sizes = [16, 16], strides = [1, 1]} : vector<16x96xf32> to vector<16x16xf32>
    %cst_55 = arith.constant dense<0.000000e+00> : vector<16x16xf32>
    %150 = tpu.matmul %147, %148, %cst_55 {dimension_numbers = #tpu.dot_dimension_numbers<[1], [1], [0], [0], [0, 0, 1, 0], [], []>} : vector<16x16xf32>, vector<16x16xf32>, vector<16x16xf32> -> vector<16x16xf32>
    %cst_56 = arith.constant 2.500000e-01 : f32
    %151 = vector.broadcast %cst_56 : f32 to vector<16x16xf32>
    %152 = arith.mulf %150, %151 : vector<16x16xf32>
    %153 = arith.addf %152, %115 : vector<16x16xf32>
    %cst_57 = arith.constant dense<0xFF800000> : vector<16xf32>
    %154 = vector.multi_reduction <maximumf>, %153, %cst_57 [1] : vector<16x16xf32> to vector<16xf32>
    %155 = vector.shape_cast %154 : vector<16xf32> to vector<16x1xf32>
    %156 = vector.broadcast %155 : vector<16x1xf32> to vector<16x16xf32>
    %157 = arith.subf %153, %156 : vector<16x16xf32>
    %158 = math.exp %157 : vector<16x16xf32>
    %cst_58 = arith.constant dense<0.000000e+00> : vector<16xf32>
    %159 = vector.multi_reduction <add>, %158, %cst_58 [1] : vector<16x16xf32> to vector<16xf32>
    %160 = vector.shape_cast %159 : vector<16xf32> to vector<16x1xf32>
    %161 = tpu.reciprocal %160 {approx = true} : vector<16x1xf32> -> vector<16x1xf32>
    %162 = vector.broadcast %161 : vector<16x1xf32> to vector<16x16xf32>
    %163 = arith.mulf %158, %162 : vector<16x16xf32>
    %cst_59 = arith.constant dense<0.000000e+00> : vector<16x16xf32>
    %164 = tpu.matmul %163, %149, %cst_59 {dimension_numbers = #tpu.dot_dimension_numbers<[1], [0], [0], [1], [0, 0, 1, 1], [], []>} : vector<16x16xf32>, vector<16x16xf32>, vector<16x16xf32> -> vector<16x16xf32>
    %165 = vector.extract_strided_slice %121 {offsets = [0, 0], sizes = [16, 32], strides = [1, 1]} : vector<32x32xf32> to vector<16x32xf32>
    %cst_60 = arith.constant dense<0.000000e+00> : vector<16x32xf32>
    %166 = tpu.matmul %164, %165, %cst_60 {dimension_numbers = #tpu.dot_dimension_numbers<[1], [0], [0], [1], [0, 0, 1, 1], [], []>} : vector<16x16xf32>, vector<16x32xf32>, vector<16x32xf32> -> vector<16x32xf32>
    %167 = vector.extract_strided_slice %146 {offsets = [0, 16], sizes = [16, 16], strides = [1, 1]} : vector<16x96xf32> to vector<16x16xf32>
    %168 = vector.extract_strided_slice %146 {offsets = [0, 48], sizes = [16, 16], strides = [1, 1]} : vector<16x96xf32> to vector<16x16xf32>
    %169 = vector.extract_strided_slice %146 {offsets = [0, 80], sizes = [16, 16], strides = [1, 1]} : vector<16x96xf32> to vector<16x16xf32>
    %cst_61 = arith.constant dense<0.000000e+00> : vector<16x16xf32>
    %170 = tpu.matmul %167, %168, %cst_61 {dimension_numbers = #tpu.dot_dimension_numbers<[1], [1], [0], [0], [0, 0, 1, 0], [], []>} : vector<16x16xf32>, vector<16x16xf32>, vector<16x16xf32> -> vector<16x16xf32>
    %cst_62 = arith.constant 2.500000e-01 : f32
    %171 = vector.broadcast %cst_62 : f32 to vector<16x16xf32>
    %172 = arith.mulf %170, %171 : vector<16x16xf32>
    %173 = arith.addf %172, %115 : vector<16x16xf32>
    %cst_63 = arith.constant dense<0xFF800000> : vector<16xf32>
    %174 = vector.multi_reduction <maximumf>, %173, %cst_63 [1] : vector<16x16xf32> to vector<16xf32>
    %175 = vector.shape_cast %174 : vector<16xf32> to vector<16x1xf32>
    %176 = vector.broadcast %175 : vector<16x1xf32> to vector<16x16xf32>
    %177 = arith.subf %173, %176 : vector<16x16xf32>
    %178 = math.exp %177 : vector<16x16xf32>
    %cst_64 = arith.constant dense<0.000000e+00> : vector<16xf32>
    %179 = vector.multi_reduction <add>, %178, %cst_64 [1] : vector<16x16xf32> to vector<16xf32>
    %180 = vector.shape_cast %179 : vector<16xf32> to vector<16x1xf32>
    %181 = tpu.reciprocal %180 {approx = true} : vector<16x1xf32> -> vector<16x1xf32>
    %182 = vector.broadcast %181 : vector<16x1xf32> to vector<16x16xf32>
    %183 = arith.mulf %178, %182 : vector<16x16xf32>
    %cst_65 = arith.constant dense<0.000000e+00> : vector<16x16xf32>
    %184 = tpu.matmul %183, %169, %cst_65 {dimension_numbers = #tpu.dot_dimension_numbers<[1], [0], [0], [1], [0, 0, 1, 1], [], []>} : vector<16x16xf32>, vector<16x16xf32>, vector<16x16xf32> -> vector<16x16xf32>
    %185 = vector.extract_strided_slice %121 {offsets = [16, 0], sizes = [16, 32], strides = [1, 1]} : vector<32x32xf32> to vector<16x32xf32>
    %cst_66 = arith.constant dense<0.000000e+00> : vector<16x32xf32>
    %186 = tpu.matmul %184, %185, %cst_66 {dimension_numbers = #tpu.dot_dimension_numbers<[1], [0], [0], [1], [0, 0, 1, 1], [], []>} : vector<16x16xf32>, vector<16x32xf32>, vector<16x32xf32> -> vector<16x32xf32>
    %187 = arith.addf %166, %186 : vector<16x32xf32>
    %188 = arith.addf %187, %114 : vector<16x32xf32>
    %189 = vector.extract_strided_slice %117 {offsets = [2, 0], sizes = [1, 32], strides = [1, 1]} : vector<4x32xf32> to vector<1x32xf32>
    %190 = vector.extract_strided_slice %117 {offsets = [3, 0], sizes = [1, 32], strides = [1, 1]} : vector<4x32xf32> to vector<1x32xf32>
    %cst_67 = arith.constant dense<0.000000e+00> : vector<16xf32>
    %191 = vector.multi_reduction <add>, %188, %cst_67 [1] : vector<16x32xf32> to vector<16xf32>
    %192 = vector.shape_cast %191 : vector<16xf32> to vector<16x1xf32>
    %cst_68 = arith.constant 3.200000e+01 : f32
    %193 = vector.broadcast %cst_68 : f32 to vector<16x1xf32>
    %194 = arith.divf %192, %193 : vector<16x1xf32>
    %195 = vector.broadcast %194 : vector<16x1xf32> to vector<16x32xf32>
    %196 = arith.subf %188, %195 : vector<16x32xf32>
    %197 = arith.mulf %196, %196 : vector<16x32xf32>
    %cst_69 = arith.constant dense<0.000000e+00> : vector<16xf32>
    %198 = vector.multi_reduction <add>, %197, %cst_69 [1] : vector<16x32xf32> to vector<16xf32>
    %199 = vector.shape_cast %198 : vector<16xf32> to vector<16x1xf32>
    %cst_70 = arith.constant 3.200000e+01 : f32
    %200 = vector.broadcast %cst_70 : f32 to vector<16x1xf32>
    %201 = arith.divf %199, %200 : vector<16x1xf32>
    %202 = vector.broadcast %194 : vector<16x1xf32> to vector<16x32xf32>
    %203 = arith.subf %188, %202 : vector<16x32xf32>
    %cst_71 = arith.constant 9.99999974E-6 : f32
    %204 = vector.broadcast %cst_71 : f32 to vector<16x1xf32>
    %205 = arith.addf %201, %204 : vector<16x1xf32>
    %206 = math.rsqrt %205 : vector<16x1xf32>
    %207 = vector.broadcast %206 : vector<16x1xf32> to vector<16x32xf32>
    %208 = arith.mulf %203, %207 : vector<16x32xf32>
    %209 = vector.broadcast %189 : vector<1x32xf32> to vector<16x32xf32>
    %210 = arith.mulf %208, %209 : vector<16x32xf32>
    %211 = vector.broadcast %190 : vector<1x32xf32> to vector<16x32xf32>
    %212 = arith.addf %210, %211 : vector<16x32xf32>
    %c0_72 = arith.constant 0 : index
    %c0_73 = arith.constant 0 : index
    %c0_74 = arith.constant 0 : index
    %213 = vector.load %arg13[%c0_72, %c0_73, %c0_74] : memref<2x32x64xf32, #tpu.memory_space<vmem>>, vector<1x32x64xf32>
    %214 = vector.shape_cast %213 : vector<1x32x64xf32> to vector<32x64xf32>
    %cst_75 = arith.constant dense<0.000000e+00> : vector<16x64xf32>
    %215 = tpu.matmul %212, %214, %cst_75 {dimension_numbers = #tpu.dot_dimension_numbers<[1], [0], [0], [1], [0, 0, 1, 1], [], []>} : vector<16x32xf32>, vector<32x64xf32>, vector<16x64xf32> -> vector<16x64xf32>
    %c0_76 = arith.constant 0 : index
    %c0_77 = arith.constant 0 : index
    %c0_78 = arith.constant 0 : index
    %216 = vector.load %arg14[%c0_76, %c0_77, %c0_78] : memref<2x1x64xf32, #tpu.memory_space<vmem>>, vector<1x1x64xf32>
    %217 = vector.shape_cast %216 : vector<1x1x64xf32> to vector<1x64xf32>
    %218 = vector.broadcast %217 : vector<1x64xf32> to vector<16x64xf32>
    %219 = arith.addf %215, %218 : vector<16x64xf32>
    %cst_79 = arith.constant 5.000000e-01 : f32
    %220 = vector.broadcast %cst_79 : f32 to vector<16x64xf32>
    %221 = arith.mulf %220, %219 : vector<16x64xf32>
    %cst_80 = arith.constant 0.707106769 : f32
    %222 = vector.broadcast %cst_80 : f32 to vector<16x64xf32>
    %223 = arith.mulf %219, %222 : vector<16x64xf32>
    %224 = math.absf %223 : vector<16x64xf32>
    %cst_81 = arith.constant 0.327591091 : f32
    %225 = vector.broadcast %cst_81 : f32 to vector<16x64xf32>
    %226 = arith.mulf %225, %224 : vector<16x64xf32>
    %cst_82 = arith.constant 1.000000e+00 : f32
    %227 = vector.broadcast %cst_82 : f32 to vector<16x64xf32>
    %228 = arith.addf %227, %226 : vector<16x64xf32>
    %cst_83 = arith.constant 1.000000e+00 : f32
    %229 = vector.broadcast %cst_83 : f32 to vector<16x64xf32>
    %230 = arith.divf %229, %228 : vector<16x64xf32>
    %cst_84 = arith.constant 1.06140542 : f32
    %231 = vector.broadcast %cst_84 : f32 to vector<16x64xf32>
    %232 = arith.mulf %231, %230 : vector<16x64xf32>
    %cst_85 = arith.constant -1.45315206 : f32
    %233 = vector.broadcast %cst_85 : f32 to vector<16x64xf32>
    %234 = arith.addf %232, %233 : vector<16x64xf32>
    %235 = arith.mulf %234, %230 : vector<16x64xf32>
    %cst_86 = arith.constant 1.42141378 : f32
    %236 = vector.broadcast %cst_86 : f32 to vector<16x64xf32>
    %237 = arith.addf %235, %236 : vector<16x64xf32>
    %238 = arith.mulf %237, %230 : vector<16x64xf32>
    %cst_87 = arith.constant -0.284496725 : f32
    %239 = vector.broadcast %cst_87 : f32 to vector<16x64xf32>
    %240 = arith.addf %238, %239 : vector<16x64xf32>
    %241 = arith.mulf %240, %230 : vector<16x64xf32>
    %cst_88 = arith.constant 0.254829586 : f32
    %242 = vector.broadcast %cst_88 : f32 to vector<16x64xf32>
    %243 = arith.addf %241, %242 : vector<16x64xf32>
    %244 = arith.mulf %243, %230 : vector<16x64xf32>
    %cst_89 = arith.constant 0.000000e+00 : f32
    %245 = vector.broadcast %cst_89 : f32 to vector<16x64xf32>
    %246 = arith.subf %245, %224 : vector<16x64xf32>
    %247 = arith.mulf %246, %224 : vector<16x64xf32>
    %248 = math.exp %247 : vector<16x64xf32>
    %249 = arith.mulf %244, %248 : vector<16x64xf32>
    %cst_90 = arith.constant 1.000000e+00 : f32
    %250 = vector.broadcast %cst_90 : f32 to vector<16x64xf32>
    %251 = arith.subf %250, %249 : vector<16x64xf32>
    %cst_91 = arith.constant 0.000000e+00 : f32
    %252 = vector.broadcast %cst_91 : f32 to vector<16x64xf32>
    %253 = arith.cmpf oge, %223, %252 : vector<16x64xf32>
    %cst_92 = arith.constant 0.000000e+00 : f32
    %254 = vector.broadcast %cst_92 : f32 to vector<16x64xf32>
    %255 = arith.subf %254, %251 : vector<16x64xf32>
    %256 = arith.select %253, %251, %255 : vector<16x64xi1>, vector<16x64xf32>
    %cst_93 = arith.constant 1.000000e+00 : f32
    %257 = vector.broadcast %cst_93 : f32 to vector<16x64xf32>
    %258 = arith.addf %257, %256 : vector<16x64xf32>
    %259 = arith.mulf %221, %258 : vector<16x64xf32>
    %c0_94 = arith.constant 0 : index
    %c0_95 = arith.constant 0 : index
    %c0_96 = arith.constant 0 : index
    %260 = vector.load %arg15[%c0_94, %c0_95, %c0_96] : memref<2x64x32xf32, #tpu.memory_space<vmem>>, vector<1x64x32xf32>
    %261 = vector.shape_cast %260 : vector<1x64x32xf32> to vector<64x32xf32>
    %cst_97 = arith.constant dense<0.000000e+00> : vector<16x32xf32>
    %262 = tpu.matmul %259, %261, %cst_97 {dimension_numbers = #tpu.dot_dimension_numbers<[1], [0], [0], [1], [0, 0, 1, 1], [], []>} : vector<16x64xf32>, vector<64x32xf32>, vector<16x32xf32> -> vector<16x32xf32>
    %c0_98 = arith.constant 0 : index
    %c0_99 = arith.constant 0 : index
    %c0_100 = arith.constant 0 : index
    %263 = vector.load %arg16[%c0_98, %c0_99, %c0_100] : memref<2x1x32xf32, #tpu.memory_space<vmem>>, vector<1x1x32xf32>
    %264 = vector.shape_cast %263 : vector<1x1x32xf32> to vector<1x32xf32>
    %265 = vector.broadcast %264 : vector<1x32xf32> to vector<16x32xf32>
    %266 = arith.addf %262, %265 : vector<16x32xf32>
    %267 = arith.addf %266, %188 : vector<16x32xf32>
    %c1 = arith.constant 1 : index
    %c0_101 = arith.constant 0 : index
    %c0_102 = arith.constant 0 : index
    %268 = vector.load %arg10[%c1, %c0_101, %c0_102] : memref<2x4x32xf32, #tpu.memory_space<vmem>>, vector<1x4x32xf32>
    %269 = vector.shape_cast %268 : vector<1x4x32xf32> to vector<4x32xf32>
    %c1_103 = arith.constant 1 : index
    %c0_104 = arith.constant 0 : index
    %c0_105 = arith.constant 0 : index
    %270 = vector.load %arg11[%c1_103, %c0_104, %c0_105] : memref<2x32x96xf32, #tpu.memory_space<vmem>>, vector<1x32x96xf32>
    %271 = vector.shape_cast %270 : vector<1x32x96xf32> to vector<32x96xf32>
    %c1_106 = arith.constant 1 : index
    %c0_107 = arith.constant 0 : index
    %c0_108 = arith.constant 0 : index
    %272 = vector.load %arg12[%c1_106, %c0_107, %c0_108] : memref<2x32x32xf32, #tpu.memory_space<vmem>>, vector<1x32x32xf32>
    %273 = vector.shape_cast %272 : vector<1x32x32xf32> to vector<32x32xf32>
    %274 = vector.extract_strided_slice %269 {offsets = [0, 0], sizes = [1, 32], strides = [1, 1]} : vector<4x32xf32> to vector<1x32xf32>
    %275 = vector.extract_strided_slice %269 {offsets = [1, 0], sizes = [1, 32], strides = [1, 1]} : vector<4x32xf32> to vector<1x32xf32>
    %cst_109 = arith.constant dense<0.000000e+00> : vector<16xf32>
    %276 = vector.multi_reduction <add>, %267, %cst_109 [1] : vector<16x32xf32> to vector<16xf32>
    %277 = vector.shape_cast %276 : vector<16xf32> to vector<16x1xf32>
    %cst_110 = arith.constant 3.200000e+01 : f32
    %278 = vector.broadcast %cst_110 : f32 to vector<16x1xf32>
    %279 = arith.divf %277, %278 : vector<16x1xf32>
    %280 = vector.broadcast %279 : vector<16x1xf32> to vector<16x32xf32>
    %281 = arith.subf %267, %280 : vector<16x32xf32>
    %282 = arith.mulf %281, %281 : vector<16x32xf32>
    %cst_111 = arith.constant dense<0.000000e+00> : vector<16xf32>
    %283 = vector.multi_reduction <add>, %282, %cst_111 [1] : vector<16x32xf32> to vector<16xf32>
    %284 = vector.shape_cast %283 : vector<16xf32> to vector<16x1xf32>
    %cst_112 = arith.constant 3.200000e+01 : f32
    %285 = vector.broadcast %cst_112 : f32 to vector<16x1xf32>
    %286 = arith.divf %284, %285 : vector<16x1xf32>
    %287 = vector.broadcast %279 : vector<16x1xf32> to vector<16x32xf32>
    %288 = arith.subf %267, %287 : vector<16x32xf32>
    %cst_113 = arith.constant 9.99999974E-6 : f32
    %289 = vector.broadcast %cst_113 : f32 to vector<16x1xf32>
    %290 = arith.addf %286, %289 : vector<16x1xf32>
    %291 = math.rsqrt %290 : vector<16x1xf32>
    %292 = vector.broadcast %291 : vector<16x1xf32> to vector<16x32xf32>
    %293 = arith.mulf %288, %292 : vector<16x32xf32>
    %294 = vector.broadcast %274 : vector<1x32xf32> to vector<16x32xf32>
    %295 = arith.mulf %293, %294 : vector<16x32xf32>
    %296 = vector.broadcast %275 : vector<1x32xf32> to vector<16x32xf32>
    %297 = arith.addf %295, %296 : vector<16x32xf32>
    %cst_114 = arith.constant dense<0.000000e+00> : vector<16x96xf32>
    %298 = tpu.matmul %297, %271, %cst_114 {dimension_numbers = #tpu.dot_dimension_numbers<[1], [0], [0], [1], [0, 0, 1, 1], [], []>} : vector<16x32xf32>, vector<32x96xf32>, vector<16x96xf32> -> vector<16x96xf32>
    %299 = vector.extract_strided_slice %298 {offsets = [0, 0], sizes = [16, 16], strides = [1, 1]} : vector<16x96xf32> to vector<16x16xf32>
    %300 = vector.extract_strided_slice %298 {offsets = [0, 32], sizes = [16, 16], strides = [1, 1]} : vector<16x96xf32> to vector<16x16xf32>
    %301 = vector.extract_strided_slice %298 {offsets = [0, 64], sizes = [16, 16], strides = [1, 1]} : vector<16x96xf32> to vector<16x16xf32>
    %cst_115 = arith.constant dense<0.000000e+00> : vector<16x16xf32>
    %302 = tpu.matmul %299, %300, %cst_115 {dimension_numbers = #tpu.dot_dimension_numbers<[1], [1], [0], [0], [0, 0, 1, 0], [], []>} : vector<16x16xf32>, vector<16x16xf32>, vector<16x16xf32> -> vector<16x16xf32>
    %cst_116 = arith.constant 2.500000e-01 : f32
    %303 = vector.broadcast %cst_116 : f32 to vector<16x16xf32>
    %304 = arith.mulf %302, %303 : vector<16x16xf32>
    %305 = arith.addf %304, %115 : vector<16x16xf32>
    %cst_117 = arith.constant dense<0xFF800000> : vector<16xf32>
    %306 = vector.multi_reduction <maximumf>, %305, %cst_117 [1] : vector<16x16xf32> to vector<16xf32>
    %307 = vector.shape_cast %306 : vector<16xf32> to vector<16x1xf32>
    %308 = vector.broadcast %307 : vector<16x1xf32> to vector<16x16xf32>
    %309 = arith.subf %305, %308 : vector<16x16xf32>
    %310 = math.exp %309 : vector<16x16xf32>
    %cst_118 = arith.constant dense<0.000000e+00> : vector<16xf32>
    %311 = vector.multi_reduction <add>, %310, %cst_118 [1] : vector<16x16xf32> to vector<16xf32>
    %312 = vector.shape_cast %311 : vector<16xf32> to vector<16x1xf32>
    %313 = tpu.reciprocal %312 {approx = true} : vector<16x1xf32> -> vector<16x1xf32>
    %314 = vector.broadcast %313 : vector<16x1xf32> to vector<16x16xf32>
    %315 = arith.mulf %310, %314 : vector<16x16xf32>
    %cst_119 = arith.constant dense<0.000000e+00> : vector<16x16xf32>
    %316 = tpu.matmul %315, %301, %cst_119 {dimension_numbers = #tpu.dot_dimension_numbers<[1], [0], [0], [1], [0, 0, 1, 1], [], []>} : vector<16x16xf32>, vector<16x16xf32>, vector<16x16xf32> -> vector<16x16xf32>
    %317 = vector.extract_strided_slice %273 {offsets = [0, 0], sizes = [16, 32], strides = [1, 1]} : vector<32x32xf32> to vector<16x32xf32>
    %cst_120 = arith.constant dense<0.000000e+00> : vector<16x32xf32>
    %318 = tpu.matmul %316, %317, %cst_120 {dimension_numbers = #tpu.dot_dimension_numbers<[1], [0], [0], [1], [0, 0, 1, 1], [], []>} : vector<16x16xf32>, vector<16x32xf32>, vector<16x32xf32> -> vector<16x32xf32>
    %319 = vector.extract_strided_slice %298 {offsets = [0, 16], sizes = [16, 16], strides = [1, 1]} : vector<16x96xf32> to vector<16x16xf32>
    %320 = vector.extract_strided_slice %298 {offsets = [0, 48], sizes = [16, 16], strides = [1, 1]} : vector<16x96xf32> to vector<16x16xf32>
    %321 = vector.extract_strided_slice %298 {offsets = [0, 80], sizes = [16, 16], strides = [1, 1]} : vector<16x96xf32> to vector<16x16xf32>
    %cst_121 = arith.constant dense<0.000000e+00> : vector<16x16xf32>
    %322 = tpu.matmul %319, %320, %cst_121 {dimension_numbers = #tpu.dot_dimension_numbers<[1], [1], [0], [0], [0, 0, 1, 0], [], []>} : vector<16x16xf32>, vector<16x16xf32>, vector<16x16xf32> -> vector<16x16xf32>
    %cst_122 = arith.constant 2.500000e-01 : f32
    %323 = vector.broadcast %cst_122 : f32 to vector<16x16xf32>
    %324 = arith.mulf %322, %323 : vector<16x16xf32>
    %325 = arith.addf %324, %115 : vector<16x16xf32>
    %cst_123 = arith.constant dense<0xFF800000> : vector<16xf32>
    %326 = vector.multi_reduction <maximumf>, %325, %cst_123 [1] : vector<16x16xf32> to vector<16xf32>
    %327 = vector.shape_cast %326 : vector<16xf32> to vector<16x1xf32>
    %328 = vector.broadcast %327 : vector<16x1xf32> to vector<16x16xf32>
    %329 = arith.subf %325, %328 : vector<16x16xf32>
    %330 = math.exp %329 : vector<16x16xf32>
    %cst_124 = arith.constant dense<0.000000e+00> : vector<16xf32>
    %331 = vector.multi_reduction <add>, %330, %cst_124 [1] : vector<16x16xf32> to vector<16xf32>
    %332 = vector.shape_cast %331 : vector<16xf32> to vector<16x1xf32>
    %333 = tpu.reciprocal %332 {approx = true} : vector<16x1xf32> -> vector<16x1xf32>
    %334 = vector.broadcast %333 : vector<16x1xf32> to vector<16x16xf32>
    %335 = arith.mulf %330, %334 : vector<16x16xf32>
    %cst_125 = arith.constant dense<0.000000e+00> : vector<16x16xf32>
    %336 = tpu.matmul %335, %321, %cst_125 {dimension_numbers = #tpu.dot_dimension_numbers<[1], [0], [0], [1], [0, 0, 1, 1], [], []>} : vector<16x16xf32>, vector<16x16xf32>, vector<16x16xf32> -> vector<16x16xf32>
    %337 = vector.extract_strided_slice %273 {offsets = [16, 0], sizes = [16, 32], strides = [1, 1]} : vector<32x32xf32> to vector<16x32xf32>
    %cst_126 = arith.constant dense<0.000000e+00> : vector<16x32xf32>
    %338 = tpu.matmul %336, %337, %cst_126 {dimension_numbers = #tpu.dot_dimension_numbers<[1], [0], [0], [1], [0, 0, 1, 1], [], []>} : vector<16x16xf32>, vector<16x32xf32>, vector<16x32xf32> -> vector<16x32xf32>
    %339 = arith.addf %318, %338 : vector<16x32xf32>
    %340 = arith.addf %339, %267 : vector<16x32xf32>
    %341 = vector.extract_strided_slice %269 {offsets = [2, 0], sizes = [1, 32], strides = [1, 1]} : vector<4x32xf32> to vector<1x32xf32>
    %342 = vector.extract_strided_slice %269 {offsets = [3, 0], sizes = [1, 32], strides = [1, 1]} : vector<4x32xf32> to vector<1x32xf32>
    %cst_127 = arith.constant dense<0.000000e+00> : vector<16xf32>
    %343 = vector.multi_reduction <add>, %340, %cst_127 [1] : vector<16x32xf32> to vector<16xf32>
    %344 = vector.shape_cast %343 : vector<16xf32> to vector<16x1xf32>
    %cst_128 = arith.constant 3.200000e+01 : f32
    %345 = vector.broadcast %cst_128 : f32 to vector<16x1xf32>
    %346 = arith.divf %344, %345 : vector<16x1xf32>
    %347 = vector.broadcast %346 : vector<16x1xf32> to vector<16x32xf32>
    %348 = arith.subf %340, %347 : vector<16x32xf32>
    %349 = arith.mulf %348, %348 : vector<16x32xf32>
    %cst_129 = arith.constant dense<0.000000e+00> : vector<16xf32>
    %350 = vector.multi_reduction <add>, %349, %cst_129 [1] : vector<16x32xf32> to vector<16xf32>
    %351 = vector.shape_cast %350 : vector<16xf32> to vector<16x1xf32>
    %cst_130 = arith.constant 3.200000e+01 : f32
    %352 = vector.broadcast %cst_130 : f32 to vector<16x1xf32>
    %353 = arith.divf %351, %352 : vector<16x1xf32>
    %354 = vector.broadcast %346 : vector<16x1xf32> to vector<16x32xf32>
    %355 = arith.subf %340, %354 : vector<16x32xf32>
    %cst_131 = arith.constant 9.99999974E-6 : f32
    %356 = vector.broadcast %cst_131 : f32 to vector<16x1xf32>
    %357 = arith.addf %353, %356 : vector<16x1xf32>
    %358 = math.rsqrt %357 : vector<16x1xf32>
    %359 = vector.broadcast %358 : vector<16x1xf32> to vector<16x32xf32>
    %360 = arith.mulf %355, %359 : vector<16x32xf32>
    %361 = vector.broadcast %341 : vector<1x32xf32> to vector<16x32xf32>
    %362 = arith.mulf %360, %361 : vector<16x32xf32>
    %363 = vector.broadcast %342 : vector<1x32xf32> to vector<16x32xf32>
    %364 = arith.addf %362, %363 : vector<16x32xf32>
    %c1_132 = arith.constant 1 : index
    %c0_133 = arith.constant 0 : index
    %c0_134 = arith.constant 0 : index
    %365 = vector.load %arg13[%c1_132, %c0_133, %c0_134] : memref<2x32x64xf32, #tpu.memory_space<vmem>>, vector<1x32x64xf32>
    %366 = vector.shape_cast %365 : vector<1x32x64xf32> to vector<32x64xf32>
    %cst_135 = arith.constant dense<0.000000e+00> : vector<16x64xf32>
    %367 = tpu.matmul %364, %366, %cst_135 {dimension_numbers = #tpu.dot_dimension_numbers<[1], [0], [0], [1], [0, 0, 1, 1], [], []>} : vector<16x32xf32>, vector<32x64xf32>, vector<16x64xf32> -> vector<16x64xf32>
    %c1_136 = arith.constant 1 : index
    %c0_137 = arith.constant 0 : index
    %c0_138 = arith.constant 0 : index
    %368 = vector.load %arg14[%c1_136, %c0_137, %c0_138] : memref<2x1x64xf32, #tpu.memory_space<vmem>>, vector<1x1x64xf32>
    %369 = vector.shape_cast %368 : vector<1x1x64xf32> to vector<1x64xf32>
    %370 = vector.broadcast %369 : vector<1x64xf32> to vector<16x64xf32>
    %371 = arith.addf %367, %370 : vector<16x64xf32>
    %cst_139 = arith.constant 5.000000e-01 : f32
    %372 = vector.broadcast %cst_139 : f32 to vector<16x64xf32>
    %373 = arith.mulf %372, %371 : vector<16x64xf32>
    %cst_140 = arith.constant 0.707106769 : f32
    %374 = vector.broadcast %cst_140 : f32 to vector<16x64xf32>
    %375 = arith.mulf %371, %374 : vector<16x64xf32>
    %376 = math.absf %375 : vector<16x64xf32>
    %cst_141 = arith.constant 0.327591091 : f32
    %377 = vector.broadcast %cst_141 : f32 to vector<16x64xf32>
    %378 = arith.mulf %377, %376 : vector<16x64xf32>
    %cst_142 = arith.constant 1.000000e+00 : f32
    %379 = vector.broadcast %cst_142 : f32 to vector<16x64xf32>
    %380 = arith.addf %379, %378 : vector<16x64xf32>
    %cst_143 = arith.constant 1.000000e+00 : f32
    %381 = vector.broadcast %cst_143 : f32 to vector<16x64xf32>
    %382 = arith.divf %381, %380 : vector<16x64xf32>
    %cst_144 = arith.constant 1.06140542 : f32
    %383 = vector.broadcast %cst_144 : f32 to vector<16x64xf32>
    %384 = arith.mulf %383, %382 : vector<16x64xf32>
    %cst_145 = arith.constant -1.45315206 : f32
    %385 = vector.broadcast %cst_145 : f32 to vector<16x64xf32>
    %386 = arith.addf %384, %385 : vector<16x64xf32>
    %387 = arith.mulf %386, %382 : vector<16x64xf32>
    %cst_146 = arith.constant 1.42141378 : f32
    %388 = vector.broadcast %cst_146 : f32 to vector<16x64xf32>
    %389 = arith.addf %387, %388 : vector<16x64xf32>
    %390 = arith.mulf %389, %382 : vector<16x64xf32>
    %cst_147 = arith.constant -0.284496725 : f32
    %391 = vector.broadcast %cst_147 : f32 to vector<16x64xf32>
    %392 = arith.addf %390, %391 : vector<16x64xf32>
    %393 = arith.mulf %392, %382 : vector<16x64xf32>
    %cst_148 = arith.constant 0.254829586 : f32
    %394 = vector.broadcast %cst_148 : f32 to vector<16x64xf32>
    %395 = arith.addf %393, %394 : vector<16x64xf32>
    %396 = arith.mulf %395, %382 : vector<16x64xf32>
    %cst_149 = arith.constant 0.000000e+00 : f32
    %397 = vector.broadcast %cst_149 : f32 to vector<16x64xf32>
    %398 = arith.subf %397, %376 : vector<16x64xf32>
    %399 = arith.mulf %398, %376 : vector<16x64xf32>
    %400 = math.exp %399 : vector<16x64xf32>
    %401 = arith.mulf %396, %400 : vector<16x64xf32>
    %cst_150 = arith.constant 1.000000e+00 : f32
    %402 = vector.broadcast %cst_150 : f32 to vector<16x64xf32>
    %403 = arith.subf %402, %401 : vector<16x64xf32>
    %cst_151 = arith.constant 0.000000e+00 : f32
    %404 = vector.broadcast %cst_151 : f32 to vector<16x64xf32>
    %405 = arith.cmpf oge, %375, %404 : vector<16x64xf32>
    %cst_152 = arith.constant 0.000000e+00 : f32
    %406 = vector.broadcast %cst_152 : f32 to vector<16x64xf32>
    %407 = arith.subf %406, %403 : vector<16x64xf32>
    %408 = arith.select %405, %403, %407 : vector<16x64xi1>, vector<16x64xf32>
    %cst_153 = arith.constant 1.000000e+00 : f32
    %409 = vector.broadcast %cst_153 : f32 to vector<16x64xf32>
    %410 = arith.addf %409, %408 : vector<16x64xf32>
    %411 = arith.mulf %373, %410 : vector<16x64xf32>
    %c1_154 = arith.constant 1 : index
    %c0_155 = arith.constant 0 : index
    %c0_156 = arith.constant 0 : index
    %412 = vector.load %arg15[%c1_154, %c0_155, %c0_156] : memref<2x64x32xf32, #tpu.memory_space<vmem>>, vector<1x64x32xf32>
    %413 = vector.shape_cast %412 : vector<1x64x32xf32> to vector<64x32xf32>
    %cst_157 = arith.constant dense<0.000000e+00> : vector<16x32xf32>
    %414 = tpu.matmul %411, %413, %cst_157 {dimension_numbers = #tpu.dot_dimension_numbers<[1], [0], [0], [1], [0, 0, 1, 1], [], []>} : vector<16x64xf32>, vector<64x32xf32>, vector<16x32xf32> -> vector<16x32xf32>
    %c1_158 = arith.constant 1 : index
    %c0_159 = arith.constant 0 : index
    %c0_160 = arith.constant 0 : index
    %415 = vector.load %arg16[%c1_158, %c0_159, %c0_160] : memref<2x1x32xf32, #tpu.memory_space<vmem>>, vector<1x1x32xf32>
    %416 = vector.shape_cast %415 : vector<1x1x32xf32> to vector<1x32xf32>
    %417 = vector.broadcast %416 : vector<1x32xf32> to vector<16x32xf32>
    %418 = arith.addf %414, %417 : vector<16x32xf32>
    %419 = arith.addf %418, %340 : vector<16x32xf32>
    %c0_161 = arith.constant 0 : index
    %c0_162 = arith.constant 0 : index
    %420 = vector.load %arg17[%c0_161, %c0_162] : memref<2x32xf32, #tpu.memory_space<vmem>>, vector<1x32xf32>
    %c1_163 = arith.constant 1 : index
    %c0_164 = arith.constant 0 : index
    %421 = vector.load %arg17[%c1_163, %c0_164] : memref<2x32xf32, #tpu.memory_space<vmem>>, vector<1x32xf32>
    %cst_165 = arith.constant dense<0.000000e+00> : vector<16xf32>
    %422 = vector.multi_reduction <add>, %419, %cst_165 [1] : vector<16x32xf32> to vector<16xf32>
    %423 = vector.shape_cast %422 : vector<16xf32> to vector<16x1xf32>
    %cst_166 = arith.constant 3.200000e+01 : f32
    %424 = vector.broadcast %cst_166 : f32 to vector<16x1xf32>
    %425 = arith.divf %423, %424 : vector<16x1xf32>
    %426 = vector.broadcast %425 : vector<16x1xf32> to vector<16x32xf32>
    %427 = arith.subf %419, %426 : vector<16x32xf32>
    %428 = arith.mulf %427, %427 : vector<16x32xf32>
    %cst_167 = arith.constant dense<0.000000e+00> : vector<16xf32>
    %429 = vector.multi_reduction <add>, %428, %cst_167 [1] : vector<16x32xf32> to vector<16xf32>
    %430 = vector.shape_cast %429 : vector<16xf32> to vector<16x1xf32>
    %cst_168 = arith.constant 3.200000e+01 : f32
    %431 = vector.broadcast %cst_168 : f32 to vector<16x1xf32>
    %432 = arith.divf %430, %431 : vector<16x1xf32>
    %433 = vector.broadcast %425 : vector<16x1xf32> to vector<16x32xf32>
    %434 = arith.subf %419, %433 : vector<16x32xf32>
    %cst_169 = arith.constant 9.99999974E-6 : f32
    %435 = vector.broadcast %cst_169 : f32 to vector<16x1xf32>
    %436 = arith.addf %432, %435 : vector<16x1xf32>
    %437 = math.rsqrt %436 : vector<16x1xf32>
    %438 = vector.broadcast %437 : vector<16x1xf32> to vector<16x32xf32>
    %439 = arith.mulf %434, %438 : vector<16x32xf32>
    %440 = vector.broadcast %420 : vector<1x32xf32> to vector<16x32xf32>
    %441 = arith.mulf %439, %440 : vector<16x32xf32>
    %442 = vector.broadcast %421 : vector<1x32xf32> to vector<16x32xf32>
    %443 = arith.addf %441, %442 : vector<16x32xf32>
    %c0_170 = arith.constant 0 : index
    %c0_171 = arith.constant 0 : index
    %444 = vector.load %arg18[%c0_170, %c0_171] : memref<2x16xf32, #tpu.memory_space<vmem>>, vector<2x16xf32>
    %cst_172 = arith.constant dense<0.000000e+00> : vector<2x32xf32>
    %445 = tpu.matmul %444, %443, %cst_172 {dimension_numbers = #tpu.dot_dimension_numbers<[1], [0], [0], [1], [0, 0, 1, 1], [], []>} : vector<2x16xf32>, vector<16x32xf32>, vector<2x32xf32> -> vector<2x32xf32>
    %c0_173 = arith.constant 0 : index
    %c0_174 = arith.constant 0 : index
    %446 = vector.load %arg19[%c0_173, %c0_174] : memref<32x10xf32, #tpu.memory_space<vmem>>, vector<32x10xf32>
    %cst_175 = arith.constant dense<0.000000e+00> : vector<2x10xf32>
    %447 = tpu.matmul %445, %446, %cst_175 {dimension_numbers = #tpu.dot_dimension_numbers<[1], [0], [0], [1], [0, 0, 1, 1], [], []>} : vector<2x32xf32>, vector<32x10xf32>, vector<2x10xf32> -> vector<2x10xf32>
    %c0_176 = arith.constant 0 : index
    %c0_177 = arith.constant 0 : index
    %448 = vector.load %arg20[%c0_176, %c0_177] : memref<1x10xf32, #tpu.memory_space<vmem>>, vector<1x10xf32>
    %449 = vector.broadcast %448 : vector<1x10xf32> to vector<2x10xf32>
    %450 = arith.addf %447, %449 : vector<2x10xf32>
    %c0_178 = arith.constant 0 : index
    %c0_179 = arith.constant 0 : index
    %451 = vector.load %arg21[%c0_178, %c0_179] : memref<2x10xf32, #tpu.memory_space<vmem>>, vector<2x10xf32>
    tpu.vector_store %arg21[%c0_178, %c0_179], %450 {strides = array<i32>} : memref<2x10xf32, #tpu.memory_space<vmem>>, vector<2x10xf32>,
    return
  }
}

</mosaic_0001>

<llo_original>
// kernel: simple_vit_forward.1
$region0: #{simple_vit_forward.1}
  #allocation0 [shape = 'u32[]', space=smem, size = 0x4, offset = 0x4, fixed_abs, tag = 'smem constant byte address 0x4 - core index']
  #allocation1 [shape = 'u32[72,128]{1,0:T(1,128)}', space=vmem, size = 0x9000, scoped, tag = 'internal scratch']
  %s0 = inlined_call_operand.vmem [shape: f32[8,192], index: 0, kind: input, shape index: {}]
  %s1 = inlined_call_operand.vmem [shape: f32[8,384], index: 1, kind: input, shape index: {}]
  %s2 = inlined_call_operand.vmem [shape: f32[2,192], index: 2, kind: input, shape index: {}]
  %s3 = inlined_call_operand.vmem [shape: f32[192,32], index: 3, kind: input, shape index: {}]
  %s4 = inlined_call_operand.vmem [shape: f32[3,32], index: 4, kind: input, shape index: {}]
  %s5 = inlined_call_operand.vmem [shape: f32[2,384], index: 5, kind: input, shape index: {}]
  %s6 = inlined_call_operand.vmem [shape: f32[384,32], index: 6, kind: input, shape index: {}]
  %s7 = inlined_call_operand.vmem [shape: f32[3,32], index: 7, kind: input, shape index: {}]
  %s8 = inlined_call_operand.vmem [shape: f32[16,32], index: 8, kind: input, shape index: {}]
  %s9 = inlined_call_operand.vmem [shape: f32[16,16], index: 9, kind: input, shape index: {}]
  %s10 = inlined_call_operand.vmem [shape: f32[2,4,32], index: 10, kind: input, shape index: {}]
  %s11 = inlined_call_operand.vmem [shape: f32[2,32,96], index: 11, kind: input, shape index: {}]
  %s12 = inlined_call_operand.vmem [shape: f32[2,32,32], index: 12, kind: input, shape index: {}]
  %s13 = inlined_call_operand.vmem [shape: f32[2,32,64], index: 13, kind: input, shape index: {}]
  %s14 = inlined_call_operand.vmem [shape: f32[2,1,64], index: 14, kind: input, shape index: {}]
  %s15 = inlined_call_operand.vmem [shape: f32[2,64,32], index: 15, kind: input, shape index: {}]
  %s16 = inlined_call_operand.vmem [shape: f32[2,1,32], index: 16, kind: input, shape index: {}]
  %s17 = inlined_call_operand.vmem [shape: f32[2,32], index: 17, kind: input, shape index: {}]
  %s18 = inlined_call_operand.vmem [shape: f32[2,16], index: 18, kind: input, shape index: {}]
  %s19 = inlined_call_operand.vmem [shape: f32[32,10], index: 19, kind: input, shape index: {}]
  %s20 = inlined_call_operand.vmem [shape: f32[1,10], index: 20, kind: input, shape index: {}]
  %s21 = inlined_call_operand.hbm [shape: f32[2,10], index: 21, kind: output, shape index: {}]
  %s22 = sld [smem:[#allocation0]]
  $region94: #{simple_vit_forward.1} parent=0
    _
  %s24 = ssub.s32 1, %s22
  %s25 = scalar_select 0, %s24, %s22
  $region1: #{simple_vit_forward.1} parent=0
    #allocation2 [shape = 'u8[1024]{0}', space=vmem, size = 0x400, scoped, tag = 'output window, operand 0, single buffered']
    #allocation3 [shape = 's32[1]{0}', space=sflag, size = 0x4, scoped, tag = 'scoped memory for simple_vit_forward.1']
    %26 = vsyncpa [#allocation3], 0
    // Predicated region
    $region2: #{simple_vit_forward.1} parent=1 // pred_check
      _
    $region3: #{simple_vit_forward.1} parent=1 // pred_check_branch
      %28 = sbr.rel (0) target = $region5
    $region4: #{simple_vit_forward.1} parent=1 // pred_region
      _
    $region5: #{simple_vit_forward.1} parent=1 // pred_fallthru
      _
    // Predicated region
    $region6: #{simple_vit_forward.1} parent=1 // pred_check
      _
    $region7: #{simple_vit_forward.1} parent=1 // pred_check_branch
      %30 = sbr.rel (0) target = $region9
    $region8: #{simple_vit_forward.1} parent=1 // pred_region
      _
    $region9: #{simple_vit_forward.1} parent=1 // pred_fallthru
      _
    // Predicated region
    $region10: #{simple_vit_forward.1} parent=1 // pred_check
      _
    $region11: #{simple_vit_forward.1} parent=1 // pred_check_branch
      %32 = sbr.rel (0) target = $region13
    $region12: #{simple_vit_forward.1} parent=1 // pred_region
      _
    $region13: #{simple_vit_forward.1} parent=1 // pred_fallthru
      _
    // Predicated region
    $region14: #{simple_vit_forward.1} parent=1 // pred_check
      _
    $region15: #{simple_vit_forward.1} parent=1 // pred_check_branch
      %34 = sbr.rel (0) target = $region17
    $region16: #{simple_vit_forward.1} parent=1 // pred_region
      _
    $region17: #{simple_vit_forward.1} parent=1 // pred_fallthru
      _
    // Predicated region
    $region18: #{simple_vit_forward.1} parent=1 // pred_check
      _
    $region19: #{simple_vit_forward.1} parent=1 // pred_check_branch
      %36 = sbr.rel (0) target = $region21
    $region20: #{simple_vit_forward.1} parent=1 // pred_region
      _
    $region21: #{simple_vit_forward.1} parent=1 // pred_fallthru
      _
    // Predicated region
    $region22: #{simple_vit_forward.1} parent=1 // pred_check
      _
    $region23: #{simple_vit_forward.1} parent=1 // pred_check_branch
      %38 = sbr.rel (0) target = $region25
    $region24: #{simple_vit_forward.1} parent=1 // pred_region
      _
    $region25: #{simple_vit_forward.1} parent=1 // pred_fallthru
      _
    // Predicated region
    $region26: #{simple_vit_forward.1} parent=1 // pred_check
      _
    $region27: #{simple_vit_forward.1} parent=1 // pred_check_branch
      %40 = sbr.rel (0) target = $region29
    $region28: #{simple_vit_forward.1} parent=1 // pred_region
      _
    $region29: #{simple_vit_forward.1} parent=1 // pred_fallthru
      _
    // Predicated region
    $region30: #{simple_vit_forward.1} parent=1 // pred_check
      _
    $region31: #{simple_vit_forward.1} parent=1 // pred_check_branch
      %42 = sbr.rel (0) target = $region33
    $region32: #{simple_vit_forward.1} parent=1 // pred_region
      _
    $region33: #{simple_vit_forward.1} parent=1 // pred_fallthru
      _
    // Predicated region
    $region34: #{simple_vit_forward.1} parent=1 // pred_check
      _
    $region35: #{simple_vit_forward.1} parent=1 // pred_check_branch
      %44 = sbr.rel (0) target = $region37
    $region36: #{simple_vit_forward.1} parent=1 // pred_region
      _
    $region37: #{simple_vit_forward.1} parent=1 // pred_fallthru
      _
    // Predicated region
    $region38: #{simple_vit_forward.1} parent=1 // pred_check
      _
    $region39: #{simple_vit_forward.1} parent=1 // pred_check_branch
      %46 = sbr.rel (0) target = $region41
    $region40: #{simple_vit_forward.1} parent=1 // pred_region
      _
    $region41: #{simple_vit_forward.1} parent=1 // pred_fallthru
      _
    // Predicated region
    $region42: #{simple_vit_forward.1} parent=1 // pred_check
      _
    $region43: #{simple_vit_forward.1} parent=1 // pred_check_branch
      %48 = sbr.rel (0) target = $region45
    $region44: #{simple_vit_forward.1} parent=1 // pred_region
      _
    $region45: #{simple_vit_forward.1} parent=1 // pred_fallthru
      _
    // Predicated region
    $region46: #{simple_vit_forward.1} parent=1 // pred_check
      _
    $region47: #{simple_vit_forward.1} parent=1 // pred_check_branch
      %50 = sbr.rel (0) target = $region49
    $region48: #{simple_vit_forward.1} parent=1 // pred_region
      _
    $region49: #{simple_vit_forward.1} parent=1 // pred_fallthru
      _
    // Predicated region
    $region50: #{simple_vit_forward.1} parent=1 // pred_check
      _
    $region51: #{simple_vit_forward.1} parent=1 // pred_check_branch
      %52 = sbr.rel (0) target = $region53
    $region52: #{simple_vit_forward.1} parent=1 // pred_region
      _
    $region53: #{simple_vit_forward.1} parent=1 // pred_fallthru
      _
    // Predicated region
    $region54: #{simple_vit_forward.1} parent=1 // pred_check
      _
    $region55: #{simple_vit_forward.1} parent=1 // pred_check_branch
      %54 = sbr.rel (0) target = $region57
    $region56: #{simple_vit_forward.1} parent=1 // pred_region
      _
    $region57: #{simple_vit_forward.1} parent=1 // pred_fallthru
      _
    // Predicated region
    $region58: #{simple_vit_forward.1} parent=1 // pred_check
      _
    $region59: #{simple_vit_forward.1} parent=1 // pred_check_branch
      %56 = sbr.rel (0) target = $region61
    $region60: #{simple_vit_forward.1} parent=1 // pred_region
      _
    $region61: #{simple_vit_forward.1} parent=1 // pred_fallthru
      _
    // Predicated region
    $region62: #{simple_vit_forward.1} parent=1 // pred_check
      _
    $region63: #{simple_vit_forward.1} parent=1 // pred_check_branch
      %58 = sbr.rel (0) target = $region65
    $region64: #{simple_vit_forward.1} parent=1 // pred_region
      _
    $region65: #{simple_vit_forward.1} parent=1 // pred_fallthru
      _
    // Predicated region
    $region66: #{simple_vit_forward.1} parent=1 // pred_check
      _
    $region67: #{simple_vit_forward.1} parent=1 // pred_check_branch
      %60 = sbr.rel (0) target = $region69
    $region68: #{simple_vit_forward.1} parent=1 // pred_region
      _
    $region69: #{simple_vit_forward.1} parent=1 // pred_fallthru
      _
    // Predicated region
    $region70: #{simple_vit_forward.1} parent=1 // pred_check
      _
    $region71: #{simple_vit_forward.1} parent=1 // pred_check_branch
      %62 = sbr.rel (0) target = $region73
    $region72: #{simple_vit_forward.1} parent=1 // pred_region
      _
    $region73: #{simple_vit_forward.1} parent=1 // pred_fallthru
      _
    // Predicated region
    $region74: #{simple_vit_forward.1} parent=1 // pred_check
      _
    $region75: #{simple_vit_forward.1} parent=1 // pred_check_branch
      %64 = sbr.rel (0) target = $region77
    $region76: #{simple_vit_forward.1} parent=1 // pred_region
      _
    $region77: #{simple_vit_forward.1} parent=1 // pred_fallthru
      _
    // Predicated region
    $region78: #{simple_vit_forward.1} parent=1 // pred_check
      _
    $region79: #{simple_vit_forward.1} parent=1 // pred_check_branch
      %66 = sbr.rel (0) target = $region81
    $region80: #{simple_vit_forward.1} parent=1 // pred_region
      _
    $region81: #{simple_vit_forward.1} parent=1 // pred_fallthru
      _
    // Predicated region
    $region82: #{simple_vit_forward.1} parent=1 // pred_check
      _
    $region83: #{simple_vit_forward.1} parent=1 // pred_check_branch
      %68 = sbr.rel (0) target = $region85
    $region84: #{simple_vit_forward.1} parent=1 // pred_region
      _
    $region85: #{simple_vit_forward.1} parent=1 // pred_fallthru
      _
    %v69 = vld [vmem:[%s1] sm:$0xff]
    %v70 = vld [vmem:[%s1 + $0x8] sm:$0xff]
    %v71 = vld [vmem:[%s1 + $0x10] sm:$0xff]
    %v72 = vld [vmem:[%s5] sm:$0x3f]
    %v73 = vld [vmem:[%s6] sm:$0xff]
    %v74 = vld [vmem:[%s6 + $0x8] sm:$0xff]
    %v75 = vld [vmem:[%s6 + $0x10] sm:$0xff]
    %v76 = vld [vmem:[%s6 + $0x18] sm:$0xff]
    %v77 = vld [vmem:[%s6 + $0x20] sm:$0xff]
    %v78 = vld [vmem:[%s6 + $0x28] sm:$0xff]
    %v79 = vld [vmem:[%s6 + $0x30] sm:$0xff]
    %v80 = vld [vmem:[%s6 + $0x38] sm:$0xff]
    %v81 = vld [vmem:[%s6 + $0x40] sm:$0xff]
    %v82 = vld [vmem:[%s6 + $0x48] sm:$0xff]
    %v83 = vld [vmem:[%s6 + $0x50] sm:$0xff]
    %v84 = vld [vmem:[%s6 + $0x58] sm:$0xff]
    %v85 = vld [vmem:[%s6 + $0x60] sm:$0xff]
    %v86 = vld [vmem:[%s6 + $0x68] sm:$0xff]
    %v87 = vld [vmem:[%s6 + $0x70] sm:$0xff]
    %v88 = vld [vmem:[%s6 + $0x78] sm:$0xff]
    %v89 = vld [vmem:[%s6 + $0x80] sm:$0xff]
    %v90 = vld [vmem:[%s6 + $0x88] sm:$0xff]
    %v91 = vld [vmem:[%s6 + $0x90] sm:$0xff]
    %v92 = vld [vmem:[%s6 + $0x98] sm:$0xff]
    %v93 = vld [vmem:[%s6 + $0xa0] sm:$0xff]
    %v94 = vld [vmem:[%s6 + $0xa8] sm:$0xff]
    %v95 = vld [vmem:[%s6 + $0xb0] sm:$0xff]
    %v96 = vld [vmem:[%s6 + $0xb8] sm:$0xff]
    %v97 = vld [vmem:[%s6 + $0xc0] sm:$0xff]
    %v98 = vld [vmem:[%s6 + $0xc8] sm:$0xff]
    %v99 = vld [vmem:[%s6 + $0xd0] sm:$0xff]
    %v100 = vld [vmem:[%s6 + $0xd8] sm:$0xff]
    %v101 = vld [vmem:[%s6 + $0xe0] sm:$0xff]
    %v102 = vld [vmem:[%s6 + $0xe8] sm:$0xff]
    %v103 = vld [vmem:[%s6 + $0xf0] sm:$0xff]
    %v104 = vld [vmem:[%s6 + $0xf8] sm:$0xff]
    %v105 = vld [vmem:[%s6 + $0x100] sm:$0xff]
    %v106 = vld [vmem:[%s6 + $0x108] sm:$0xff]
    %v107 = vld [vmem:[%s6 + $0x110] sm:$0xff]
    %v108 = vld [vmem:[%s6 + $0x118] sm:$0xff]
    %v109 = vld [vmem:[%s6 + $0x120] sm:$0xff]
    %v110 = vld [vmem:[%s6 + $0x128] sm:$0xff]
    %v111 = vld [vmem:[%s6 + $0x130] sm:$0xff]
    %v112 = vld [vmem:[%s6 + $0x138] sm:$0xff]
    %v113 = vld [vmem:[%s6 + $0x140] sm:$0xff]
    %v114 = vld [vmem:[%s6 + $0x148] sm:$0xff]
    %v115 = vld [vmem:[%s6 + $0x150] sm:$0xff]
    %v116 = vld [vmem:[%s6 + $0x158] sm:$0xff]
    %v117 = vld [vmem:[%s6 + $0x160] sm:$0xff]
    %v118 = vld [vmem:[%s6 + $0x168] sm:$0xff]
    %v119 = vld [vmem:[%s6 + $0x170] sm:$0xff]
    %v120 = vld [vmem:[%s6 + $0x178] sm:$0xff]
    %v121 = vld [vmem:[%s7] sm:$0x7]
    %v122 = vadd.f32 %v69, %v70
    %v123 = vadd.f32 %v122, %v71
    %124 = vadd.xlane.f32.xlu0 %v123
    %v125 = vpop.xlane.xlu0 %124
    %v126 = vrcp.pop 384.0
    %v127 = vmul.f32 384.0, %v126
    %v128 = vsub.f32 1.0, %v127
    %v129 = vmul.f32 %v126, %v128
    %v130 = vadd.f32 %v126, %v129
    %vm131 = vweird.f32 %v126
    %v132 = vsel %vm131, %v126, %v130
    %v133 = vmul.f32 %v125, %v132
    %v134 = vsub.f32 %v69, %v133
    %v135 = vsub.f32 %v70, %v133
    %v136 = vsub.f32 %v71, %v133
    %v137 = vmul.f32 %v134, %v134
    %v138 = vmul.f32 %v135, %v135
    %v139 = vmul.f32 %v136, %v136
    %v140 = vadd.f32 %v137, %v138
    %v141 = vadd.f32 %v140, %v139
    %142 = vadd.xlane.f32.xlu0 %v141
    %v143 = vpop.xlane.xlu0 %142
    %v144 = vmul.f32 %v143, %v132
    %v145 = vadd.f32 %v144, 1e-05
    %v146 = vrsqrt.pop %v145
    %v147 = vmul.f32 %v146, %v145
    %v148 = vmul.f32 %v147, %v146
    %v149 = vmul.f32 0.5, %v148
    %v150 = vsub.f32 1.5, %v149
    %v151 = vmul.f32 %v146, %v150
    %vm152 = vweird.f32 %v145
    %vm153 = vweird.f32 %v146
    %vm154 = vmor %vm152, %vm153
    %v155 = vsel %vm154, %v146, %v151
    %v156 = vmul.f32 %v134, %v155
    %v157 = vmul.f32 %v135, %v155
    %v158 = vmul.f32 %v136, %v155
    %v160 = vperm.slane %v72, 0
    %v161 = vperm.slane %v72, 2
    %v162 = vperm.slane %v72, 4
    %v166 = vperm.slane %v160, 0
    %v167 = vperm.slane %v161, 0
    %v168 = vperm.slane %v162, 0
    %v169 = vmul.f32 %v156, %v166
    %v170 = vmul.f32 %v157, %v167
    %v171 = vmul.f32 %v158, %v168
    %v172 = vperm.slane %v72, 1
    %v173 = vperm.slane %v72, 3
    %v174 = vperm.slane %v72, 5
    %v178 = vperm.slane %v172, 1
    %v179 = vperm.slane %v173, 1
    %v180 = vperm.slane %v174, 1
    %v181 = vadd.f32 %v169, %v178
    %v182 = vadd.f32 %v170, %v179
    %v183 = vadd.f32 %v171, %v180
    %v184 = vperm.slane %v121, 0
    %185 = vmatpush.msra.mxu0 %v88
    %186 = vmatpush.msra.mxu0 %v87
    %187 = vmatpush.msra.mxu0 %v86
    %188 = vmatpush.msra.mxu0 %v85
    %189 = vmatpush.msra.mxu0 %v84
    %190 = vmatpush.msra.mxu0 %v83
    %191 = vmatpush.msra.mxu0 %v82
    %192 = vmatpush.msra.mxu0 %v81
    %193 = vmatpush.msra.mxu0 %v80
    %194 = vmatpush.msra.mxu0 %v79
    %195 = vmatpush.msra.mxu0 %v78
    %196 = vmatpush.msra.mxu0 %v77
    %197 = vmatpush.msra.mxu0 %v76
    %198 = vmatpush.msra.mxu0 %v75
    %199 = vmatpush.msra.mxu0 %v74
    %200 = vmatpush.msra.mxu0 %v73
    %201 = vmatmul.f32.gmra.mxu0 %v181
    %v202 = vpop.f32.mrf.mxu0
    %v203 = vadd.f32 %v184, %v202
    %204 = vdwg.mxu0
    %205 = vmatpush.msra.mxu0 %v104
    %206 = vmatpush.msra.mxu0 %v103
    %207 = vmatpush.msra.mxu0 %v102
    %208 = vmatpush.msra.mxu0 %v101
    %209 = vmatpush.msra.mxu0 %v100
    %210 = vmatpush.msra.mxu0 %v99
    %211 = vmatpush.msra.mxu0 %v98
    %212 = vmatpush.msra.mxu0 %v97
    %213 = vmatpush.msra.mxu0 %v96
    %214 = vmatpush.msra.mxu0 %v95
    %215 = vmatpush.msra.mxu0 %v94
    %216 = vmatpush.msra.mxu0 %v93
    %217 = vmatpush.msra.mxu0 %v92
    %218 = vmatpush.msra.mxu0 %v91
    %219 = vmatpush.msra.mxu0 %v90
    %220 = vmatpush.msra.mxu0 %v89
    %221 = vmatmul.f32.gmra.mxu0 %v182
    %v222 = vpop.f32.mrf.mxu0
    %v223 = vadd.f32 %v203, %v222
    %224 = vdwg.mxu0
    %225 = vmatpush.msra.mxu0 %v120
    %226 = vmatpush.msra.mxu0 %v119
    %227 = vmatpush.msra.mxu0 %v118
    %228 = vmatpush.msra.mxu0 %v117
    %229 = vmatpush.msra.mxu0 %v116
    %230 = vmatpush.msra.mxu0 %v115
    %231 = vmatpush.msra.mxu0 %v114
    %232 = vmatpush.msra.mxu0 %v113
    %233 = vmatpush.msra.mxu0 %v112
    %234 = vmatpush.msra.mxu0 %v111
    %235 = vmatpush.msra.mxu0 %v110
    %236 = vmatpush.msra.mxu0 %v109
    %237 = vmatpush.msra.mxu0 %v108
    %238 = vmatpush.msra.mxu0 %v107
    %239 = vmatpush.msra.mxu0 %v106
    %240 = vmatpush.msra.mxu0 %v105
    %241 = vmatmul.f32.gmra.mxu0 %v183
    %v242 = vpop.f32.mrf.mxu0
    %v243 = vadd.f32 %v223, %v242
    %244 = vdwg.mxu0
    %vm245 = vcmask 261120
    %v246 = vsel %vm245, %v243, 0.0
    %247 = vadd.xlane.f32.xlu0 %v246
    %v248 = vpop.xlane.xlu0 %247
    %v249 = vrcp.pop 32.0
    %v250 = vmul.f32 32.0, %v249
    %v251 = vsub.f32 1.0, %v250
    %v252 = vmul.f32 %v249, %v251
    %v253 = vadd.f32 %v249, %v252
    %vm254 = vweird.f32 %v249
    %v255 = vsel %vm254, %v249, %v253
    %v256 = vmul.f32 %v248, %v255
    %v257 = vsub.f32 %v243, %v256
    %v258 = vmul.f32 %v257, %v257
    %v259 = vsel %vm245, %v258, 0.0
    %260 = vadd.xlane.f32.xlu0 %v259
    %v261 = vpop.xlane.xlu0 %260
    %v262 = vmul.f32 %v261, %v255
    %v263 = vadd.f32 %v262, 1e-05
    %v264 = vrsqrt.pop %v263
    %v265 = vmul.f32 %v264, %v263
    %v266 = vmul.f32 %v265, %v264
    %v267 = vmul.f32 0.5, %v266
    %v268 = vsub.f32 1.5, %v267
    %v269 = vmul.f32 %v264, %v268
    %vm270 = vweird.f32 %v263
    %vm271 = vweird.f32 %v264
    %vm272 = vmor %vm270, %vm271
    %v273 = vsel %vm272, %v264, %v269
    %v274 = vmul.f32 %v257, %v273
    %v275 = vperm.slane %v121, 1
    %v276 = vmul.f32 %v274, %v275
    %v277 = vperm.slane %v121, 2
    %v278 = vadd.f32 %v276, %v277
    %v279 = vld [vmem:[%s0] sm:$0xff]
    %v280 = vld [vmem:[%s0 + $0x8] sm:$0xff]
    %v281 = vld [vmem:[%s2] sm:$0xf]
    %v282 = vld [vmem:[%s3] sm:$0xff]
    %v283 = vld [vmem:[%s3 + $0x8] sm:$0xff]
    %v284 = vld [vmem:[%s3 + $0x10] sm:$0xff]
    %v285 = vld [vmem:[%s3 + $0x18] sm:$0xff]
    %v286 = vld [vmem:[%s3 + $0x20] sm:$0xff]
    %v287 = vld [vmem:[%s3 + $0x28] sm:$0xff]
    %v288 = vld [vmem:[%s3 + $0x30] sm:$0xff]
    %v289 = vld [vmem:[%s3 + $0x38] sm:$0xff]
    %v290 = vld [vmem:[%s3 + $0x40] sm:$0xff]
    %v291 = vld [vmem:[%s3 + $0x48] sm:$0xff]
    %v292 = vld [vmem:[%s3 + $0x50] sm:$0xff]
    %v293 = vld [vmem:[%s3 + $0x58] sm:$0xff]
    %v294 = vld [vmem:[%s3 + $0x60] sm:$0xff]
    %v295 = vld [vmem:[%s3 + $0x68] sm:$0xff]
    %v296 = vld [vmem:[%s3 + $0x70] sm:$0xff]
    %v297 = vld [vmem:[%s3 + $0x78] sm:$0xff]
    %v298 = vld [vmem:[%s3 + $0x80] sm:$0xff]
    %v299 = vld [vmem:[%s3 + $0x88] sm:$0xff]
    %v300 = vld [vmem:[%s3 + $0x90] sm:$0xff]
    %v301 = vld [vmem:[%s3 + $0x98] sm:$0xff]
    %v302 = vld [vmem:[%s3 + $0xa0] sm:$0xff]
    %v303 = vld [vmem:[%s3 + $0xa8] sm:$0xff]
    %v304 = vld [vmem:[%s3 + $0xb0] sm:$0xff]
    %v305 = vld [vmem:[%s3 + $0xb8] sm:$0xff]
    %v306 = vld [vmem:[%s4] sm:$0x7]
    %vm307 = vcmask 523264
    %v308 = vsel %vm307, %v280, 0.0
    %v309 = vadd.f32 %v279, %v308
    %310 = vadd.xlane.f32.xlu0 %v309
    %v311 = vpop.xlane.xlu0 %310
    %v312 = vrcp.pop 192.0
    %v313 = vmul.f32 192.0, %v312
    %v314 = vsub.f32 1.0, %v313
    %v315 = vmul.f32 %v312, %v314
    %v316 = vadd.f32 %v312, %v315
    %vm317 = vweird.f32 %v312
    %v318 = vsel %vm317, %v312, %v316
    %v319 = vmul.f32 %v311, %v318
    %v320 = vsub.f32 %v279, %v319
    %v321 = vsub.f32 %v280, %v319
    %v322 = vmul.f32 %v320, %v320
    %v323 = vmul.f32 %v321, %v321
    %v324 = vsel %vm307, %v323, 0.0
    %v325 = vadd.f32 %v322, %v324
    %326 = vadd.xlane.f32.xlu0 %v325
    %v327 = vpop.xlane.xlu0 %326
    %v328 = vmul.f32 %v327, %v318
    %v329 = vadd.f32 %v328, 1e-05
    %v330 = vrsqrt.pop %v329
    %v331 = vmul.f32 %v330, %v329
    %v332 = vmul.f32 %v331, %v330
    %v333 = vmul.f32 0.5, %v332
    %v334 = vsub.f32 1.5, %v333
    %v335 = vmul.f32 %v330, %v334
    %vm336 = vweird.f32 %v329
    %vm337 = vweird.f32 %v330
    %vm338 = vmor %vm336, %vm337
    %v339 = vsel %vm338, %v330, %v335
    %v340 = vmul.f32 %v320, %v339
    %v341 = vmul.f32 %v321, %v339
    %v343 = vperm.slane %v281, 0
    %v344 = vperm.slane %v281, 2
    %v347 = vperm.slane %v343, 0
    %v348 = vperm.slane %v344, 0
    %v349 = vmul.f32 %v340, %v347
    %v350 = vmul.f32 %v341, %v348
    %v351 = vperm.slane %v281, 1
    %v352 = vperm.slane %v281, 3
    %v355 = vperm.slane %v351, 1
    %v356 = vperm.slane %v352, 1
    %v357 = vadd.f32 %v349, %v355
    %v358 = vadd.f32 %v350, %v356
    %v359 = vperm.slane %v306, 0
    %v361 = vsel %vm307, %v358, 0
    %363 = vmatpush.msra.mxu0 %v297
    %364 = vmatpush.msra.mxu0 %v296
    %365 = vmatpush.msra.mxu0 %v295
    %366 = vmatpush.msra.mxu0 %v294
    %367 = vmatpush.msra.mxu0 %v293
    %368 = vmatpush.msra.mxu0 %v292
    %369 = vmatpush.msra.mxu0 %v291
    %370 = vmatpush.msra.mxu0 %v290
    %371 = vmatpush.msra.mxu0 %v289
    %372 = vmatpush.msra.mxu0 %v288
    %373 = vmatpush.msra.mxu0 %v287
    %374 = vmatpush.msra.mxu0 %v286
    %375 = vmatpush.msra.mxu0 %v285
    %376 = vmatpush.msra.mxu0 %v284
    %377 = vmatpush.msra.mxu0 %v283
    %378 = vmatpush.msra.mxu0 %v282
    %379 = vmatmul.f32.gmra.mxu0 %v357
    %v380 = vpop.f32.mrf.mxu0
    %v381 = vadd.f32 %v359, %v380
    %382 = vdwg.mxu0
    %383 = vmatpush.msra.mxu0 0.0
    %384 = vmatpush.msra.mxu0 0.0
    %385 = vmatpush.msra.mxu0 0.0
    %386 = vmatpush.msra.mxu0 0.0
    %387 = vmatpush.msra.mxu0 0.0
    %388 = vmatpush.msra.mxu0 0.0
    %389 = vmatpush.msra.mxu0 0.0
    %390 = vmatpush.msra.mxu0 0.0
    %391 = vmatpush.msra.mxu0 %v305
    %392 = vmatpush.msra.mxu0 %v304
    %393 = vmatpush.msra.mxu0 %v303
    %394 = vmatpush.msra.mxu0 %v302
    %395 = vmatpush.msra.mxu0 %v301
    %396 = vmatpush.msra.mxu0 %v300
    %397 = vmatpush.msra.mxu0 %v299
    %398 = vmatpush.msra.mxu0 %v298
    %399 = vmatmul.f32.gmra.mxu0 %v361
    %v400 = vpop.f32.mrf.mxu0
    %v401 = vadd.f32 %v381, %v400
    %402 = vdwg.mxu0
    %v403 = vsel %vm245, %v401, 0.0
    %404 = vadd.xlane.f32.xlu0 %v403
    %v405 = vpop.xlane.xlu0 %404
    %v406 = vmul.f32 %v405, %v255
    %v407 = vsub.f32 %v401, %v406
    %v408 = vmul.f32 %v407, %v407
    %v409 = vsel %vm245, %v408, 0.0
    %410 = vadd.xlane.f32.xlu0 %v409
    %v411 = vpop.xlane.xlu0 %410
    %v412 = vmul.f32 %v411, %v255
    %v413 = vadd.f32 %v412, 1e-05
    %v414 = vrsqrt.pop %v413
    %v415 = vmul.f32 %v414, %v413
    %v416 = vmul.f32 %v415, %v414
    %v417 = vmul.f32 0.5, %v416
    %v418 = vsub.f32 1.5, %v417
    %v419 = vmul.f32 %v414, %v418
    %vm420 = vweird.f32 %v413
    %vm421 = vweird.f32 %v414
    %vm422 = vmor %vm420, %vm421
    %v423 = vsel %vm422, %v414, %v419
    %v424 = vmul.f32 %v407, %v423
    %v425 = vperm.slane %v306, 1
    %v426 = vmul.f32 %v424, %v425
    %v427 = vperm.slane %v306, 2
    %v428 = vadd.f32 %v426, %v427
    %v429 = vld [vmem:[%s8] sm:$0xff]
    %v430 = vld [vmem:[%s8 + $0x8] sm:$0xff]
    %v431 = vadd.f32 %v278, %v429
    %v432 = vadd.f32 %v428, %v430
    %v433 = vld [vmem:[%s9] sm:$0xff]
    %v434 = vld [vmem:[%s9 + $0x8] sm:$0xff]
    %v435 = vld [vmem:[%s10] sm:$0xf]
    %v436 = vld [vmem:[%s11] sm:$0xff]
    %v437 = vld [vmem:[%s11 + $0x8] sm:$0xff]
    %v438 = vld [vmem:[%s11 + $0x10] sm:$0xff]
    %v439 = vld [vmem:[%s11 + $0x18] sm:$0xff]
    %v440 = vld [vmem:[%s12] sm:$0xff]
    %v441 = vld [vmem:[%s12 + $0x8] sm:$0xff]
    %v442 = vld [vmem:[%s12 + $0x10] sm:$0xff]
    %v443 = vld [vmem:[%s12 + $0x18] sm:$0xff]
    %v444 = vsel %vm245, %v431, 0.0
    %445 = vadd.xlane.f32.xlu0 %v444
    %v446 = vpop.xlane.xlu0 %445
    %v447 = vsel %vm245, %v432, 0.0
    %448 = vadd.xlane.f32.xlu0 %v447
    %v449 = vpop.xlane.xlu0 %448
    %v450 = vmul.f32 %v446, %v255
    %v451 = vmul.f32 %v449, %v255
    %v452 = vsub.f32 %v431, %v450
    %v453 = vsub.f32 %v432, %v451
    %v454 = vmul.f32 %v452, %v452
    %v455 = vmul.f32 %v453, %v453
    %v456 = vsel %vm245, %v454, 0.0
    %457 = vadd.xlane.f32.xlu0 %v456
    %v458 = vpop.xlane.xlu0 %457
    %v459 = vsel %vm245, %v455, 0.0
    %460 = vadd.xlane.f32.xlu0 %v459
    %v461 = vpop.xlane.xlu0 %460
    %v462 = vmul.f32 %v458, %v255
    %v463 = vmul.f32 %v461, %v255
    %v464 = vadd.f32 %v462, 1e-05
    %v465 = vadd.f32 %v463, 1e-05
    %v466 = vrsqrt.pop %v464
    %v467 = vmul.f32 %v466, %v464
    %v468 = vmul.f32 %v467, %v466
    %v469 = vmul.f32 0.5, %v468
    %v470 = vsub.f32 1.5, %v469
    %v471 = vmul.f32 %v466, %v470
    %vm472 = vweird.f32 %v464
    %vm473 = vweird.f32 %v466
    %vm474 = vmor %vm472, %vm473
    %v475 = vsel %vm474, %v466, %v471
    %v476 = vrsqrt.pop %v465
    %v477 = vmul.f32 %v476, %v465
    %v478 = vmul.f32 %v477, %v476
    %v479 = vmul.f32 0.5, %v478
    %v480 = vsub.f32 1.5, %v479
    %v481 = vmul.f32 %v476, %v480
    %vm482 = vweird.f32 %v465
    %vm483 = vweird.f32 %v476
    %vm484 = vmor %vm482, %vm483
    %v485 = vsel %vm484, %v476, %v481
    %v486 = vmul.f32 %v452, %v475
    %v487 = vmul.f32 %v453, %v485
    %v488 = vperm.slane %v435, 0
    %v489 = vmul.f32 %v486, %v488
    %v490 = vmul.f32 %v487, %v488
    %v491 = vperm.slane %v435, 1
    %v492 = vadd.f32 %v489, %v491
    %v493 = vadd.f32 %v490, %v491
    %v495 = vsel %vm245, %v492, 0
    %v498 = vsel %vm245, %v493, 0
    %500 = vmatpush.msra.mxu0 0.0
    %501 = vmatpush.msra.mxu0 0.0
    %502 = vmatpush.msra.mxu0 0.0
    %503 = vmatpush.msra.mxu0 0.0
    %504 = vmatpush.msra.mxu0 0.0
    %505 = vmatpush.msra.mxu0 0.0
    %506 = vmatpush.msra.mxu0 0.0
    %507 = vmatpush.msra.mxu0 0.0
    %508 = vmatpush.msra.mxu0 0.0
    %509 = vmatpush.msra.mxu0 0.0
    %510 = vmatpush.msra.mxu0 0.0
    %511 = vmatpush.msra.mxu0 0.0
    %512 = vmatpush.msra.mxu0 %v439
    %513 = vmatpush.msra.mxu0 %v438
    %514 = vmatpush.msra.mxu0 %v437
    %515 = vmatpush.msra.mxu0 %v436
    %516 = vmatmul.f32.gmra.mxu0 %v495
    %v517 = vpop.f32.mrf.mxu0
    %v518 = vadd.f32 0.0, %v517
    %519 = vmatmul.f32.gmra.mxu0 %v498
    %v520 = vpop.f32.mrf.mxu0
    %v521 = vadd.f32 0.0, %v520
    %522 = vdwg.mxu0
    %525 = vrot.lane.b32.xlu0 %v518, 96
    %v526 = vpop.permute.xlu0 %525
    %527 = vrot.lane.b32.xlu0 %v521, 96
    %v528 = vpop.permute.xlu0 %527
    %vm529 = vcmask 130048
    %v530 = vsel %vm529, %v518, 0
    %v532 = vsel %vm529, %v521, 0
    %v534 = vsel %vm529, %v526, 0
    %v536 = vsel %vm529, %v528, 0
    %538 = vmatpush.xpose.msra.mxu0 0.0
    %539 = vmatpush.xpose.msra.mxu0 0.0
    %540 = vmatpush.xpose.msra.mxu0 0.0
    %541 = vmatpush.xpose.msra.mxu0 0.0
    %542 = vmatpush.xpose.msra.mxu0 0.0
    %543 = vmatpush.xpose.msra.mxu0 0.0
    %544 = vmatpush.xpose.msra.mxu0 0.0
    %545 = vmatpush.xpose.msra.mxu0 0.0
    %546 = vmatpush.xpose.msra.mxu0 0.0
    %547 = vmatpush.xpose.msra.mxu0 0.0
    %548 = vmatpush.xpose.msra.mxu0 0.0
    %549 = vmatpush.xpose.msra.mxu0 0.0
    %550 = vmatpush.xpose.msra.mxu0 0.0
    %551 = vmatpush.xpose.msra.mxu0 0.0
    %552 = vmatpush.xpose.msra.mxu0 %v536
    %553 = vmatpush.xpose.msra.mxu0 %v534
    %554 = vmatmul.f32.gmra.mxu0 %v530
    %v555 = vpop.f32.mrf.mxu0
    %v556 = vadd.f32 0.0, %v555
    %557 = vmatmul.f32.gmra.mxu0 %v532
    %v558 = vpop.f32.mrf.mxu0
    %v559 = vadd.f32 0.0, %v558
    %560 = vdwg.mxu0
    %v561 = vmul.f32 %v556, 0.25
    %v562 = vmul.f32 %v559, 0.25
    %v563 = vadd.f32 %v561, %v433
    %v564 = vadd.f32 %v562, %v434
    %v565 = vsel %vm529, %v563, -inf
    %566 = vmax.xlane.f32.xlu0 %v565
    %v567 = vpop.xlane.xlu0 %566
    %v568 = vsel %vm529, %v564, -inf
    %569 = vmax.xlane.f32.xlu0 %v568
    %v570 = vpop.xlane.xlu0 %569
    %v571 = vsub.f32 %v563, %v567
    %v572 = vsub.f32 %v564, %v570
    %v573 = vmul.f32 %v571, 1.442695
    %v574 = vpow.pop %v573
    %v575 = vmul.f32 %v572, 1.442695
    %v576 = vpow.pop %v575
    %v577 = vsel %vm529, %v574, 0.0
    %578 = vadd.xlane.f32.xlu0 %v577
    %v579 = vpop.xlane.xlu0 %578
    %v580 = vsel %vm529, %v576, 0.0
    %581 = vadd.xlane.f32.xlu0 %v580
    %v582 = vpop.xlane.xlu0 %581
    %v583 = vrcp.pop %v579
    %v584 = vrcp.pop %v582
    %v585 = vmul.f32 %v574, %v583
    %v586 = vmul.f32 %v576, %v584
    %587 = vrot.lane.b32.xlu0 %v518, 64
    %v588 = vpop.permute.xlu0 %587
    %589 = vrot.lane.b32.xlu0 %v521, 64
    %v590 = vpop.permute.xlu0 %589
    %v594 = vsel %vm529, %v585, 0
    %v597 = vsel %vm529, %v586, 0
    %599 = vmatpush.msra.mxu0 0.0
    %600 = vmatpush.msra.mxu0 0.0
    %601 = vmatpush.msra.mxu0 0.0
    %602 = vmatpush.msra.mxu0 0.0
    %603 = vmatpush.msra.mxu0 0.0
    %604 = vmatpush.msra.mxu0 0.0
    %605 = vmatpush.msra.mxu0 0.0
    %606 = vmatpush.msra.mxu0 0.0
    %607 = vmatpush.msra.mxu0 0.0
    %608 = vmatpush.msra.mxu0 0.0
    %609 = vmatpush.msra.mxu0 0.0
    %610 = vmatpush.msra.mxu0 0.0
    %611 = vmatpush.msra.mxu0 0.0
    %612 = vmatpush.msra.mxu0 0.0
    %613 = vmatpush.msra.mxu0 %v590
    %614 = vmatpush.msra.mxu0 %v588
    %615 = vmatmul.f32.gmra.mxu0 %v594
    %v616 = vpop.f32.mrf.mxu0
    %v617 = vadd.f32 0.0, %v616
    %618 = vmatmul.f32.gmra.mxu0 %v597
    %v619 = vpop.f32.mrf.mxu0
    %v620 = vadd.f32 0.0, %v619
    %621 = vdwg.mxu0
    %622 = vrot.lane.b32.xlu0 %v518, 112
    %v623 = vpop.permute.xlu0 %622
    %624 = vrot.lane.b32.xlu0 %v521, 112
    %v625 = vpop.permute.xlu0 %624
    %626 = vrot.lane.b32.xlu0 %v518, 80
    %v627 = vpop.permute.xlu0 %626
    %628 = vrot.lane.b32.xlu0 %v521, 80
    %v629 = vpop.permute.xlu0 %628
    %v630 = vsel %vm529, %v623, 0
    %v632 = vsel %vm529, %v625, 0
    %v634 = vsel %vm529, %v627, 0
    %v636 = vsel %vm529, %v629, 0
    %638 = vmatpush.xpose.msra.mxu0 0.0
    %639 = vmatpush.xpose.msra.mxu0 0.0
    %640 = vmatpush.xpose.msra.mxu0 0.0
    %641 = vmatpush.xpose.msra.mxu0 0.0
    %642 = vmatpush.xpose.msra.mxu0 0.0
    %643 = vmatpush.xpose.msra.mxu0 0.0
    %644 = vmatpush.xpose.msra.mxu0 0.0
    %645 = vmatpush.xpose.msra.mxu0 0.0
    %646 = vmatpush.xpose.msra.mxu0 0.0
    %647 = vmatpush.xpose.msra.mxu0 0.0
    %648 = vmatpush.xpose.msra.mxu0 0.0
    %649 = vmatpush.xpose.msra.mxu0 0.0
    %650 = vmatpush.xpose.msra.mxu0 0.0
    %651 = vmatpush.xpose.msra.mxu0 0.0
    %652 = vmatpush.xpose.msra.mxu0 %v636
    %653 = vmatpush.xpose.msra.mxu0 %v634
    %654 = vmatmul.f32.gmra.mxu0 %v630
    %v655 = vpop.f32.mrf.mxu0
    %v656 = vadd.f32 0.0, %v655
    %657 = vmatmul.f32.gmra.mxu0 %v632
    %v658 = vpop.f32.mrf.mxu0
    %v659 = vadd.f32 0.0, %v658
    %660 = vdwg.mxu0
    %v661 = vmul.f32 %v656, 0.25
    %v662 = vmul.f32 %v659, 0.25
    %v663 = vadd.f32 %v661, %v433
    %v664 = vadd.f32 %v662, %v434
    %v665 = vsel %vm529, %v663, -inf
    %666 = vmax.xlane.f32.xlu0 %v665
    %v667 = vpop.xlane.xlu0 %666
    %v668 = vsel %vm529, %v664, -inf
    %669 = vmax.xlane.f32.xlu0 %v668
    %v670 = vpop.xlane.xlu0 %669
    %v671 = vsub.f32 %v663, %v667
    %v672 = vsub.f32 %v664, %v670
    %v673 = vmul.f32 %v671, 1.442695
    %v674 = vpow.pop %v673
    %v675 = vmul.f32 %v672, 1.442695
    %v676 = vpow.pop %v675
    %v677 = vsel %vm529, %v674, 0.0
    %678 = vadd.xlane.f32.xlu0 %v677
    %v679 = vpop.xlane.xlu0 %678
    %v680 = vsel %vm529, %v676, 0.0
    %681 = vadd.xlane.f32.xlu0 %v680
    %v682 = vpop.xlane.xlu0 %681
    %v683 = vrcp.pop %v679
    %v684 = vrcp.pop %v682
    %v685 = vmul.f32 %v674, %v683
    %v686 = vmul.f32 %v676, %v684
    %687 = vrot.lane.b32.xlu0 %v518, 48
    %v688 = vpop.permute.xlu0 %687
    %689 = vrot.lane.b32.xlu0 %v521, 48
    %v690 = vpop.permute.xlu0 %689
    %v694 = vsel %vm529, %v685, 0
    %v697 = vsel %vm529, %v686, 0
    %699 = vmatpush.msra.mxu0 0.0
    %700 = vmatpush.msra.mxu0 0.0
    %701 = vmatpush.msra.mxu0 0.0
    %702 = vmatpush.msra.mxu0 0.0
    %703 = vmatpush.msra.mxu0 0.0
    %704 = vmatpush.msra.mxu0 0.0
    %705 = vmatpush.msra.mxu0 0.0
    %706 = vmatpush.msra.mxu0 0.0
    %707 = vmatpush.msra.mxu0 0.0
    %708 = vmatpush.msra.mxu0 0.0
    %709 = vmatpush.msra.mxu0 0.0
    %710 = vmatpush.msra.mxu0 0.0
    %711 = vmatpush.msra.mxu0 0.0
    %712 = vmatpush.msra.mxu0 0.0
    %713 = vmatpush.msra.mxu0 %v690
    %714 = vmatpush.msra.mxu0 %v688
    %715 = vmatmul.f32.gmra.mxu0 %v694
    %v716 = vpop.f32.mrf.mxu0
    %v717 = vadd.f32 0.0, %v716
    %718 = vmatmul.f32.gmra.mxu0 %v697
    %v719 = vpop.f32.mrf.mxu0
    %v720 = vadd.f32 0.0, %v719
    %721 = vdwg.mxu0
    %v723 = vsel %vm529, %v717, 0
    %v726 = vsel %vm529, %v720, 0
    %728 = vmatpush.msra.mxu0 0.0
    %729 = vmatpush.msra.mxu0 0.0
    %730 = vmatpush.msra.mxu0 0.0
    %731 = vmatpush.msra.mxu0 0.0
    %732 = vmatpush.msra.mxu0 0.0
    %733 = vmatpush.msra.mxu0 0.0
    %734 = vmatpush.msra.mxu0 0.0
    %735 = vmatpush.msra.mxu0 0.0
    %736 = vmatpush.msra.mxu0 0.0
    %737 = vmatpush.msra.mxu0 0.0
    %738 = vmatpush.msra.mxu0 0.0
    %739 = vmatpush.msra.mxu0 0.0
    %740 = vmatpush.msra.mxu0 0.0
    %741 = vmatpush.msra.mxu0 0.0
    %742 = vmatpush.msra.mxu0 %v443
    %743 = vmatpush.msra.mxu0 %v442
    %744 = vmatmul.f32.gmra.mxu0 %v723
    %v745 = vpop.f32.mrf.mxu0
    %v746 = vadd.f32 0.0, %v745
    %747 = vmatmul.f32.gmra.mxu0 %v726
    %v748 = vpop.f32.mrf.mxu0
    %v749 = vadd.f32 0.0, %v748
    %750 = vdwg.mxu0
    %v752 = vsel %vm529, %v617, 0
    %v755 = vsel %vm529, %v620, 0
    %757 = vmatpush.msra.mxu0 0.0
    %758 = vmatpush.msra.mxu0 0.0
    %759 = vmatpush.msra.mxu0 0.0
    %760 = vmatpush.msra.mxu0 0.0
    %761 = vmatpush.msra.mxu0 0.0
    %762 = vmatpush.msra.mxu0 0.0
    %763 = vmatpush.msra.mxu0 0.0
    %764 = vmatpush.msra.mxu0 0.0
    %765 = vmatpush.msra.mxu0 0.0
    %766 = vmatpush.msra.mxu0 0.0
    %767 = vmatpush.msra.mxu0 0.0
    %768 = vmatpush.msra.mxu0 0.0
    %769 = vmatpush.msra.mxu0 0.0
    %770 = vmatpush.msra.mxu0 0.0
    %771 = vmatpush.msra.mxu0 %v441
    %772 = vmatpush.msra.mxu0 %v440
    %773 = vmatmul.f32.gmra.mxu0 %v752
    %v774 = vpop.f32.mrf.mxu0
    %v775 = vadd.f32 %v746, %v774
    %776 = vmatmul.f32.gmra.mxu0 %v755
    %v777 = vpop.f32.mrf.mxu0
    %v778 = vadd.f32 %v749, %v777
    %779 = vdwg.mxu0
    %v780 = vadd.f32 %v775, %v431
    %v781 = vadd.f32 %v778, %v432
    %v782 = vsel %vm245, %v780, 0.0
    %783 = vadd.xlane.f32.xlu0 %v782
    %v784 = vpop.xlane.xlu0 %783
    %v785 = vsel %vm245, %v781, 0.0
    %786 = vadd.xlane.f32.xlu0 %v785
    %v787 = vpop.xlane.xlu0 %786
    %v788 = vmul.f32 %v784, %v255
    %v789 = vmul.f32 %v787, %v255
    %v790 = vsub.f32 %v780, %v788
    %v791 = vsub.f32 %v781, %v789
    %v792 = vmul.f32 %v790, %v790
    %v793 = vmul.f32 %v791, %v791
    %v794 = vsel %vm245, %v792, 0.0
    %795 = vadd.xlane.f32.xlu0 %v794
    %v796 = vpop.xlane.xlu0 %795
    %v797 = vsel %vm245, %v793, 0.0
    %798 = vadd.xlane.f32.xlu0 %v797
    %v799 = vpop.xlane.xlu0 %798
    %v800 = vmul.f32 %v796, %v255
    %v801 = vmul.f32 %v799, %v255
    %v802 = vadd.f32 %v800, 1e-05
    %v803 = vadd.f32 %v801, 1e-05
    %v804 = vrsqrt.pop %v802
    %v805 = vmul.f32 %v804, %v802
    %v806 = vmul.f32 %v805, %v804
    %v807 = vmul.f32 0.5, %v806
    %v808 = vsub.f32 1.5, %v807
    %v809 = vmul.f32 %v804, %v808
    %vm810 = vweird.f32 %v802
    %vm811 = vweird.f32 %v804
    %vm812 = vmor %vm810, %vm811
    %v813 = vsel %vm812, %v804, %v809
    %v814 = vrsqrt.pop %v803
    %v815 = vmul.f32 %v814, %v803
    %v816 = vmul.f32 %v815, %v814
    %v817 = vmul.f32 0.5, %v816
    %v818 = vsub.f32 1.5, %v817
    %v819 = vmul.f32 %v814, %v818
    %vm820 = vweird.f32 %v803
    %vm821 = vweird.f32 %v814
    %vm822 = vmor %vm820, %vm821
    %v823 = vsel %vm822, %v814, %v819
    %v824 = vmul.f32 %v790, %v813
    %v825 = vmul.f32 %v791, %v823
    %v826 = vperm.slane %v435, 2
    %v827 = vmul.f32 %v824, %v826
    %v828 = vmul.f32 %v825, %v826
    %v829 = vperm.slane %v435, 3
    %v830 = vadd.f32 %v827, %v829
    %v831 = vadd.f32 %v828, %v829
    %v832 = vld [vmem:[%s13] sm:$0xff]
    %v833 = vld [vmem:[%s13 + $0x8] sm:$0xff]
    %v834 = vld [vmem:[%s13 + $0x10] sm:$0xff]
    %v835 = vld [vmem:[%s13 + $0x18] sm:$0xff]
    %v836 = vld [vmem:[%s14] sm:$0x1]
    %v838 = vperm.slane %v836, 0
    %v841 = vsel %vm245, %v830, 0
    %v844 = vsel %vm245, %v831, 0
    %846 = vmatpush.msra.mxu0 0.0
    %847 = vmatpush.msra.mxu0 0.0
    %848 = vmatpush.msra.mxu0 0.0
    %849 = vmatpush.msra.mxu0 0.0
    %850 = vmatpush.msra.mxu0 0.0
    %851 = vmatpush.msra.mxu0 0.0
    %852 = vmatpush.msra.mxu0 0.0
    %853 = vmatpush.msra.mxu0 0.0
    %854 = vmatpush.msra.mxu0 0.0
    %855 = vmatpush.msra.mxu0 0.0
    %856 = vmatpush.msra.mxu0 0.0
    %857 = vmatpush.msra.mxu0 0.0
    %858 = vmatpush.msra.mxu0 %v835
    %859 = vmatpush.msra.mxu0 %v834
    %860 = vmatpush.msra.mxu0 %v833
    %861 = vmatpush.msra.mxu0 %v832
    %862 = vmatmul.f32.gmra.mxu0 %v841
    %v863 = vpop.f32.mrf.mxu0
    %v864 = vadd.f32 %v838, %v863
    %865 = vmatmul.f32.gmra.mxu0 %v844
    %v866 = vpop.f32.mrf.mxu0
    %v867 = vadd.f32 %v838, %v866
    %868 = vdwg.mxu0
    %v869 = vmul.f32 %v864, 0.5
    %v870 = vmul.f32 %v867, 0.5
    %v871 = vmul.f32 %v864, 0.70710677
    %v872 = vmul.f32 %v867, 0.70710677
    %v873 = vand.u32 2147483647, %v871
    %v874 = vand.u32 2147483647, %v872
    %v875 = vmul.f32 %v873, 0.3275911
    %v876 = vmul.f32 %v874, 0.3275911
    %v877 = vadd.f32 %v875, 1.0
    %v878 = vadd.f32 %v876, 1.0
    %v879 = vrcp.pop %v877
    %v880 = vmul.f32 %v877, %v879
    %v881 = vsub.f32 1.0, %v880
    %v882 = vmul.f32 %v879, %v881
    %v883 = vadd.f32 %v879, %v882
    %vm884 = vweird.f32 %v877
    %vm885 = vweird.f32 %v879
    %vm886 = vmor %vm884, %vm885
    %v887 = vsel %vm886, %v879, %v883
    %v888 = vand.u32 2147483647, %v877
    %vm889 = vcmp.eq.f32.partialorder %v888, 8.507059e+37
    %v890 = vand.u32 %v877, 2147483648
    %v891 = vor.u32 1.1754944e-38, %v890
    %v892 = vsel %vm889, %v891, %v887
    %v893 = vmul.f32 1.0, %v892
    %v894 = vrcp.pop %v878
    %v895 = vmul.f32 %v878, %v894
    %v896 = vsub.f32 1.0, %v895
    %v897 = vmul.f32 %v894, %v896
    %v898 = vadd.f32 %v894, %v897
    %vm899 = vweird.f32 %v878
    %vm900 = vweird.f32 %v894
    %vm901 = vmor %vm899, %vm900
    %v902 = vsel %vm901, %v894, %v898
    %v903 = vand.u32 2147483647, %v878
    %vm904 = vcmp.eq.f32.partialorder %v903, 8.507059e+37
    %v905 = vand.u32 %v878, 2147483648
    %v906 = vor.u32 1.1754944e-38, %v905
    %v907 = vsel %vm904, %v906, %v902
    %v908 = vmul.f32 1.0, %v907
    %v909 = vmul.f32 %v893, 1.0614054
    %v910 = vmul.f32 %v908, 1.0614054
    %v911 = vadd.f32 %v909, -1.4531521
    %v912 = vadd.f32 %v910, -1.4531521
    %v913 = vmul.f32 %v911, %v893
    %v914 = vmul.f32 %v912, %v908
    %v915 = vadd.f32 %v913, 1.4214138
    %v916 = vadd.f32 %v914, 1.4214138
    %v917 = vmul.f32 %v915, %v893
    %v918 = vmul.f32 %v916, %v908
    %v919 = vadd.f32 %v917, -0.28449672
    %v920 = vadd.f32 %v918, -0.28449672
    %v921 = vmul.f32 %v919, %v893
    %v922 = vmul.f32 %v920, %v908
    %v923 = vadd.f32 %v921, 0.2548296
    %v924 = vadd.f32 %v922, 0.2548296
    %v925 = vmul.f32 %v923, %v893
    %v926 = vmul.f32 %v924, %v908
    %v927 = vsub.f32 0.0, %v873
    %v928 = vsub.f32 0.0, %v874
    %v929 = vmul.f32 %v927, %v873
    %v930 = vmul.f32 %v928, %v874
    %v931 = vmul.f32 %v929, 1.442695
    %v932 = vpow.pop %v931
    %v933 = vmul.f32 %v930, 1.442695
    %v934 = vpow.pop %v933
    %v935 = vmul.f32 %v925, %v932
    %v936 = vmul.f32 %v926, %v934
    %v937 = vsub.f32 1.0, %v935
    %v938 = vsub.f32 1.0, %v936
    %vm939 = vcmp.ge.f32.partialorder %v871, 0.0
    %vm940 = vcmp.ge.f32.partialorder %v872, 0.0
    %v941 = vsub.f32 0.0, %v937
    %v942 = vsub.f32 0.0, %v938
    %v943 = vsel %vm939, %v937, %v941
    %v944 = vsel %vm940, %v938, %v942
    %v945 = vadd.f32 %v943, 1.0
    %v946 = vadd.f32 %v944, 1.0
    %v947 = vmul.f32 %v869, %v945
    %v948 = vmul.f32 %v870, %v946
    %v949 = vld [vmem:[%s15] sm:$0xff]
    %v950 = vld [vmem:[%s15 + $0x8] sm:$0xff]
    %v951 = vld [vmem:[%s15 + $0x10] sm:$0xff]
    %v952 = vld [vmem:[%s15 + $0x18] sm:$0xff]
    %v953 = vld [vmem:[%s15 + $0x20] sm:$0xff]
    %v954 = vld [vmem:[%s15 + $0x28] sm:$0xff]
    %v955 = vld [vmem:[%s15 + $0x30] sm:$0xff]
    %v956 = vld [vmem:[%s15 + $0x38] sm:$0xff]
    %v957 = vld [vmem:[%s16] sm:$0x1]
    %v959 = vperm.slane %v957, 0
    %v962 = vsel %vm307, %v947, 0
    %v965 = vsel %vm307, %v948, 0
    %967 = vmatpush.msra.mxu0 0.0
    %968 = vmatpush.msra.mxu0 0.0
    %969 = vmatpush.msra.mxu0 0.0
    %970 = vmatpush.msra.mxu0 0.0
    %971 = vmatpush.msra.mxu0 0.0
    %972 = vmatpush.msra.mxu0 0.0
    %973 = vmatpush.msra.mxu0 0.0
    %974 = vmatpush.msra.mxu0 0.0
    %975 = vmatpush.msra.mxu0 %v956
    %976 = vmatpush.msra.mxu0 %v955
    %977 = vmatpush.msra.mxu0 %v954
    %978 = vmatpush.msra.mxu0 %v953
    %979 = vmatpush.msra.mxu0 %v952
    %980 = vmatpush.msra.mxu0 %v951
    %981 = vmatpush.msra.mxu0 %v950
    %982 = vmatpush.msra.mxu0 %v949
    %983 = vmatmul.f32.gmra.mxu0 %v962
    %v984 = vpop.f32.mrf.mxu0
    %v985 = vadd.f32 %v959, %v984
    %986 = vmatmul.f32.gmra.mxu0 %v965
    %v987 = vpop.f32.mrf.mxu0
    %v988 = vadd.f32 %v959, %v987
    %989 = vdwg.mxu0
    %v990 = vadd.f32 %v985, %v780
    %v991 = vadd.f32 %v988, %v781
    %s992 = scalar_lea.vmem %s10, 4
    %v993 = vld [vmem:[%s992] sm:$0xf]
    %s994 = scalar_lea.vmem %s11, 32
    %v995 = vld [vmem:[%s994] sm:$0xff]
    %v996 = vld [vmem:[%s994 + $0x8] sm:$0xff]
    %v997 = vld [vmem:[%s994 + $0x10] sm:$0xff]
    %v998 = vld [vmem:[%s994 + $0x18] sm:$0xff]
    %s999 = scalar_lea.vmem %s12, 32
    %v1000 = vld [vmem:[%s999] sm:$0xff]
    %v1001 = vld [vmem:[%s999 + $0x8] sm:$0xff]
    %v1002 = vld [vmem:[%s999 + $0x10] sm:$0xff]
    %v1003 = vld [vmem:[%s999 + $0x18] sm:$0xff]
    %v1004 = vsel %vm245, %v990, 0.0
    %1005 = vadd.xlane.f32.xlu0 %v1004
    %v1006 = vpop.xlane.xlu0 %1005
    %v1007 = vsel %vm245, %v991, 0.0
    %1008 = vadd.xlane.f32.xlu0 %v1007
    %v1009 = vpop.xlane.xlu0 %1008
    %v1010 = vmul.f32 %v1006, %v255
    %v1011 = vmul.f32 %v1009, %v255
    %v1012 = vsub.f32 %v990, %v1010
    %v1013 = vsub.f32 %v991, %v1011
    %v1014 = vmul.f32 %v1012, %v1012
    %v1015 = vmul.f32 %v1013, %v1013
    %v1016 = vsel %vm245, %v1014, 0.0
    %1017 = vadd.xlane.f32.xlu0 %v1016
    %v1018 = vpop.xlane.xlu0 %1017
    %v1019 = vsel %vm245, %v1015, 0.0
    %1020 = vadd.xlane.f32.xlu0 %v1019
    %v1021 = vpop.xlane.xlu0 %1020
    %v1022 = vmul.f32 %v1018, %v255
    %v1023 = vmul.f32 %v1021, %v255
    %v1024 = vadd.f32 %v1022, 1e-05
    %v1025 = vadd.f32 %v1023, 1e-05
    %v1026 = vrsqrt.pop %v1024
    %v1027 = vmul.f32 %v1026, %v1024
    %v1028 = vmul.f32 %v1027, %v1026
    %v1029 = vmul.f32 0.5, %v1028
    %v1030 = vsub.f32 1.5, %v1029
    %v1031 = vmul.f32 %v1026, %v1030
    %vm1032 = vweird.f32 %v1024
    %vm1033 = vweird.f32 %v1026
    %vm1034 = vmor %vm1032, %vm1033
    %v1035 = vsel %vm1034, %v1026, %v1031
    %v1036 = vrsqrt.pop %v1025
    %v1037 = vmul.f32 %v1036, %v1025
    %v1038 = vmul.f32 %v1037, %v1036
    %v1039 = vmul.f32 0.5, %v1038
    %v1040 = vsub.f32 1.5, %v1039
    %v1041 = vmul.f32 %v1036, %v1040
    %vm1042 = vweird.f32 %v1025
    %vm1043 = vweird.f32 %v1036
    %vm1044 = vmor %vm1042, %vm1043
    %v1045 = vsel %vm1044, %v1036, %v1041
    %v1046 = vmul.f32 %v1012, %v1035
    %v1047 = vmul.f32 %v1013, %v1045
    %v1048 = vperm.slane %v993, 0
    %v1049 = vmul.f32 %v1046, %v1048
    %v1050 = vmul.f32 %v1047, %v1048
    %v1051 = vperm.slane %v993, 1
    %v1052 = vadd.f32 %v1049, %v1051
    %v1053 = vadd.f32 %v1050, %v1051
    %v1055 = vsel %vm245, %v1052, 0
    %v1058 = vsel %vm245, %v1053, 0
    %1060 = vmatpush.msra.mxu0 0.0
    %1061 = vmatpush.msra.mxu0 0.0
    %1062 = vmatpush.msra.mxu0 0.0
    %1063 = vmatpush.msra.mxu0 0.0
    %1064 = vmatpush.msra.mxu0 0.0
    %1065 = vmatpush.msra.mxu0 0.0
    %1066 = vmatpush.msra.mxu0 0.0
    %1067 = vmatpush.msra.mxu0 0.0
    %1068 = vmatpush.msra.mxu0 0.0
    %1069 = vmatpush.msra.mxu0 0.0
    %1070 = vmatpush.msra.mxu0 0.0
    %1071 = vmatpush.msra.mxu0 0.0
    %1072 = vmatpush.msra.mxu0 %v998
    %1073 = vmatpush.msra.mxu0 %v997
    %1074 = vmatpush.msra.mxu0 %v996
    %1075 = vmatpush.msra.mxu0 %v995
    %1076 = vmatmul.f32.gmra.mxu0 %v1055
    %v1077 = vpop.f32.mrf.mxu0
    %v1078 = vadd.f32 0.0, %v1077
    %1079 = vmatmul.f32.gmra.mxu0 %v1058
    %v1080 = vpop.f32.mrf.mxu0
    %v1081 = vadd.f32 0.0, %v1080
    %1082 = vdwg.mxu0
    %1085 = vrot.lane.b32.xlu0 %v1078, 96
    %v1086 = vpop.permute.xlu0 %1085
    %1087 = vrot.lane.b32.xlu0 %v1081, 96
    %v1088 = vpop.permute.xlu0 %1087
    %v1089 = vsel %vm529, %v1078, 0
    %v1091 = vsel %vm529, %v1081, 0
    %v1093 = vsel %vm529, %v1086, 0
    %v1095 = vsel %vm529, %v1088, 0
    %1097 = vmatpush.xpose.msra.mxu0 0.0
    %1098 = vmatpush.xpose.msra.mxu0 0.0
    %1099 = vmatpush.xpose.msra.mxu0 0.0
    %1100 = vmatpush.xpose.msra.mxu0 0.0
    %1101 = vmatpush.xpose.msra.mxu0 0.0
    %1102 = vmatpush.xpose.msra.mxu0 0.0
    %1103 = vmatpush.xpose.msra.mxu0 0.0
    %1104 = vmatpush.xpose.msra.mxu0 0.0
    %1105 = vmatpush.xpose.msra.mxu0 0.0
    %1106 = vmatpush.xpose.msra.mxu0 0.0
    %1107 = vmatpush.xpose.msra.mxu0 0.0
    %1108 = vmatpush.xpose.msra.mxu0 0.0
    %1109 = vmatpush.xpose.msra.mxu0 0.0
    %1110 = vmatpush.xpose.msra.mxu0 0.0
    %1111 = vmatpush.xpose.msra.mxu0 %v1095
    %1112 = vmatpush.xpose.msra.mxu0 %v1093
    %1113 = vmatmul.f32.gmra.mxu0 %v1089
    %v1114 = vpop.f32.mrf.mxu0
    %v1115 = vadd.f32 0.0, %v1114
    %1116 = vmatmul.f32.gmra.mxu0 %v1091
    %v1117 = vpop.f32.mrf.mxu0
    %v1118 = vadd.f32 0.0, %v1117
    %1119 = vdwg.mxu0
    %v1120 = vmul.f32 %v1115, 0.25
    %v1121 = vmul.f32 %v1118, 0.25
    %v1122 = vadd.f32 %v1120, %v433
    %v1123 = vadd.f32 %v1121, %v434
    %v1124 = vsel %vm529, %v1122, -inf
    %1125 = vmax.xlane.f32.xlu0 %v1124
    %v1126 = vpop.xlane.xlu0 %1125
    %v1127 = vsel %vm529, %v1123, -inf
    %1128 = vmax.xlane.f32.xlu0 %v1127
    %v1129 = vpop.xlane.xlu0 %1128
    %v1130 = vsub.f32 %v1122, %v1126
    %v1131 = vsub.f32 %v1123, %v1129
    %v1132 = vmul.f32 %v1130, 1.442695
    %v1133 = vpow.pop %v1132
    %v1134 = vmul.f32 %v1131, 1.442695
    %v1135 = vpow.pop %v1134
    %v1136 = vsel %vm529, %v1133, 0.0
    %1137 = vadd.xlane.f32.xlu0 %v1136
    %v1138 = vpop.xlane.xlu0 %1137
    %v1139 = vsel %vm529, %v1135, 0.0
    %1140 = vadd.xlane.f32.xlu0 %v1139
    %v1141 = vpop.xlane.xlu0 %1140
    %v1142 = vrcp.pop %v1138
    %v1143 = vrcp.pop %v1141
    %v1144 = vmul.f32 %v1133, %v1142
    %v1145 = vmul.f32 %v1135, %v1143
    %1146 = vrot.lane.b32.xlu0 %v1078, 64
    %v1147 = vpop.permute.xlu0 %1146
    %1148 = vrot.lane.b32.xlu0 %v1081, 64
    %v1149 = vpop.permute.xlu0 %1148
    %v1153 = vsel %vm529, %v1144, 0
    %v1156 = vsel %vm529, %v1145, 0
    %1158 = vmatpush.msra.mxu0 0.0
    %1159 = vmatpush.msra.mxu0 0.0
    %1160 = vmatpush.msra.mxu0 0.0
    %1161 = vmatpush.msra.mxu0 0.0
    %1162 = vmatpush.msra.mxu0 0.0
    %1163 = vmatpush.msra.mxu0 0.0
    %1164 = vmatpush.msra.mxu0 0.0
    %1165 = vmatpush.msra.mxu0 0.0
    %1166 = vmatpush.msra.mxu0 0.0
    %1167 = vmatpush.msra.mxu0 0.0
    %1168 = vmatpush.msra.mxu0 0.0
    %1169 = vmatpush.msra.mxu0 0.0
    %1170 = vmatpush.msra.mxu0 0.0
    %1171 = vmatpush.msra.mxu0 0.0
    %1172 = vmatpush.msra.mxu0 %v1149
    %1173 = vmatpush.msra.mxu0 %v1147
    %1174 = vmatmul.f32.gmra.mxu0 %v1153
    %v1175 = vpop.f32.mrf.mxu0
    %v1176 = vadd.f32 0.0, %v1175
    %1177 = vmatmul.f32.gmra.mxu0 %v1156
    %v1178 = vpop.f32.mrf.mxu0
    %v1179 = vadd.f32 0.0, %v1178
    %1180 = vdwg.mxu0
    %1181 = vrot.lane.b32.xlu0 %v1078, 112
    %v1182 = vpop.permute.xlu0 %1181
    %1183 = vrot.lane.b32.xlu0 %v1081, 112
    %v1184 = vpop.permute.xlu0 %1183
    %1185 = vrot.lane.b32.xlu0 %v1078, 80
    %v1186 = vpop.permute.xlu0 %1185
    %1187 = vrot.lane.b32.xlu0 %v1081, 80
    %v1188 = vpop.permute.xlu0 %1187
    %v1189 = vsel %vm529, %v1182, 0
    %v1191 = vsel %vm529, %v1184, 0
    %v1193 = vsel %vm529, %v1186, 0
    %v1195 = vsel %vm529, %v1188, 0
    %1197 = vmatpush.xpose.msra.mxu0 0.0
    %1198 = vmatpush.xpose.msra.mxu0 0.0
    %1199 = vmatpush.xpose.msra.mxu0 0.0
    %1200 = vmatpush.xpose.msra.mxu0 0.0
    %1201 = vmatpush.xpose.msra.mxu0 0.0
    %1202 = vmatpush.xpose.msra.mxu0 0.0
    %1203 = vmatpush.xpose.msra.mxu0 0.0
    %1204 = vmatpush.xpose.msra.mxu0 0.0
    %1205 = vmatpush.xpose.msra.mxu0 0.0
    %1206 = vmatpush.xpose.msra.mxu0 0.0
    %1207 = vmatpush.xpose.msra.mxu0 0.0
    %1208 = vmatpush.xpose.msra.mxu0 0.0
    %1209 = vmatpush.xpose.msra.mxu0 0.0
    %1210 = vmatpush.xpose.msra.mxu0 0.0
    %1211 = vmatpush.xpose.msra.mxu0 %v1195
    %1212 = vmatpush.xpose.msra.mxu0 %v1193
    %1213 = vmatmul.f32.gmra.mxu0 %v1189
    %v1214 = vpop.f32.mrf.mxu0
    %v1215 = vadd.f32 0.0, %v1214
    %1216 = vmatmul.f32.gmra.mxu0 %v1191
    %v1217 = vpop.f32.mrf.mxu0
    %v1218 = vadd.f32 0.0, %v1217
    %1219 = vdwg.mxu0
    %v1220 = vmul.f32 %v1215, 0.25
    %v1221 = vmul.f32 %v1218, 0.25
    %v1222 = vadd.f32 %v1220, %v433
    %v1223 = vadd.f32 %v1221, %v434
    %v1224 = vsel %vm529, %v1222, -inf
    %1225 = vmax.xlane.f32.xlu0 %v1224
    %v1226 = vpop.xlane.xlu0 %1225
    %v1227 = vsel %vm529, %v1223, -inf
    %1228 = vmax.xlane.f32.xlu0 %v1227
    %v1229 = vpop.xlane.xlu0 %1228
    %v1230 = vsub.f32 %v1222, %v1226
    %v1231 = vsub.f32 %v1223, %v1229
    %v1232 = vmul.f32 %v1230, 1.442695
    %v1233 = vpow.pop %v1232
    %v1234 = vmul.f32 %v1231, 1.442695
    %v1235 = vpow.pop %v1234
    %v1236 = vsel %vm529, %v1233, 0.0
    %1237 = vadd.xlane.f32.xlu0 %v1236
    %v1238 = vpop.xlane.xlu0 %1237
    %v1239 = vsel %vm529, %v1235, 0.0
    %1240 = vadd.xlane.f32.xlu0 %v1239
    %v1241 = vpop.xlane.xlu0 %1240
    %v1242 = vrcp.pop %v1238
    %v1243 = vrcp.pop %v1241
    %v1244 = vmul.f32 %v1233, %v1242
    %v1245 = vmul.f32 %v1235, %v1243
    %1246 = vrot.lane.b32.xlu0 %v1078, 48
    %v1247 = vpop.permute.xlu0 %1246
    %1248 = vrot.lane.b32.xlu0 %v1081, 48
    %v1249 = vpop.permute.xlu0 %1248
    %v1253 = vsel %vm529, %v1244, 0
    %v1256 = vsel %vm529, %v1245, 0
    %1258 = vmatpush.msra.mxu0 0.0
    %1259 = vmatpush.msra.mxu0 0.0
    %1260 = vmatpush.msra.mxu0 0.0
    %1261 = vmatpush.msra.mxu0 0.0
    %1262 = vmatpush.msra.mxu0 0.0
    %1263 = vmatpush.msra.mxu0 0.0
    %1264 = vmatpush.msra.mxu0 0.0
    %1265 = vmatpush.msra.mxu0 0.0
    %1266 = vmatpush.msra.mxu0 0.0
    %1267 = vmatpush.msra.mxu0 0.0
    %1268 = vmatpush.msra.mxu0 0.0
    %1269 = vmatpush.msra.mxu0 0.0
    %1270 = vmatpush.msra.mxu0 0.0
    %1271 = vmatpush.msra.mxu0 0.0
    %1272 = vmatpush.msra.mxu0 %v1249
    %1273 = vmatpush.msra.mxu0 %v1247
    %1274 = vmatmul.f32.gmra.mxu0 %v1253
    %v1275 = vpop.f32.mrf.mxu0
    %v1276 = vadd.f32 0.0, %v1275
    %1277 = vmatmul.f32.gmra.mxu0 %v1256
    %v1278 = vpop.f32.mrf.mxu0
    %v1279 = vadd.f32 0.0, %v1278
    %1280 = vdwg.mxu0
    %v1282 = vsel %vm529, %v1276, 0
    %v1285 = vsel %vm529, %v1279, 0
    %1287 = vmatpush.msra.mxu0 0.0
    %1288 = vmatpush.msra.mxu0 0.0
    %1289 = vmatpush.msra.mxu0 0.0
    %1290 = vmatpush.msra.mxu0 0.0
    %1291 = vmatpush.msra.mxu0 0.0
    %1292 = vmatpush.msra.mxu0 0.0
    %1293 = vmatpush.msra.mxu0 0.0
    %1294 = vmatpush.msra.mxu0 0.0
    %1295 = vmatpush.msra.mxu0 0.0
    %1296 = vmatpush.msra.mxu0 0.0
    %1297 = vmatpush.msra.mxu0 0.0
    %1298 = vmatpush.msra.mxu0 0.0
    %1299 = vmatpush.msra.mxu0 0.0
    %1300 = vmatpush.msra.mxu0 0.0
    %1301 = vmatpush.msra.mxu0 %v1003
    %1302 = vmatpush.msra.mxu0 %v1002
    %1303 = vmatmul.f32.gmra.mxu0 %v1282
    %v1304 = vpop.f32.mrf.mxu0
    %v1305 = vadd.f32 0.0, %v1304
    %1306 = vmatmul.f32.gmra.mxu0 %v1285
    %v1307 = vpop.f32.mrf.mxu0
    %v1308 = vadd.f32 0.0, %v1307
    %1309 = vdwg.mxu0
    %v1311 = vsel %vm529, %v1176, 0
    %v1314 = vsel %vm529, %v1179, 0
    %1316 = vmatpush.msra.mxu0 0.0
    %1317 = vmatpush.msra.mxu0 0.0
    %1318 = vmatpush.msra.mxu0 0.0
    %1319 = vmatpush.msra.mxu0 0.0
    %1320 = vmatpush.msra.mxu0 0.0
    %1321 = vmatpush.msra.mxu0 0.0
    %1322 = vmatpush.msra.mxu0 0.0
    %1323 = vmatpush.msra.mxu0 0.0
    %1324 = vmatpush.msra.mxu0 0.0
    %1325 = vmatpush.msra.mxu0 0.0
    %1326 = vmatpush.msra.mxu0 0.0
    %1327 = vmatpush.msra.mxu0 0.0
    %1328 = vmatpush.msra.mxu0 0.0
    %1329 = vmatpush.msra.mxu0 0.0
    %1330 = vmatpush.msra.mxu0 %v1001
    %1331 = vmatpush.msra.mxu0 %v1000
    %1332 = vmatmul.f32.gmra.mxu0 %v1311
    %v1333 = vpop.f32.mrf.mxu0
    %v1334 = vadd.f32 %v1305, %v1333
    %1335 = vmatmul.f32.gmra.mxu0 %v1314
    %v1336 = vpop.f32.mrf.mxu0
    %v1337 = vadd.f32 %v1308, %v1336
    %1338 = vdwg.mxu0
    %v1339 = vadd.f32 %v1334, %v990
    %v1340 = vadd.f32 %v1337, %v991
    %v1341 = vsel %vm245, %v1339, 0.0
    %1342 = vadd.xlane.f32.xlu0 %v1341
    %v1343 = vpop.xlane.xlu0 %1342
    %v1344 = vsel %vm245, %v1340, 0.0
    %1345 = vadd.xlane.f32.xlu0 %v1344
    %v1346 = vpop.xlane.xlu0 %1345
    %v1347 = vmul.f32 %v1343, %v255
    %v1348 = vmul.f32 %v1346, %v255
    %v1349 = vsub.f32 %v1339, %v1347
    %v1350 = vsub.f32 %v1340, %v1348
    %v1351 = vmul.f32 %v1349, %v1349
    %v1352 = vmul.f32 %v1350, %v1350
    %v1353 = vsel %vm245, %v1351, 0.0
    %1354 = vadd.xlane.f32.xlu0 %v1353
    %v1355 = vpop.xlane.xlu0 %1354
    %v1356 = vsel %vm245, %v1352, 0.0
    %1357 = vadd.xlane.f32.xlu0 %v1356
    %v1358 = vpop.xlane.xlu0 %1357
    %v1359 = vmul.f32 %v1355, %v255
    %v1360 = vmul.f32 %v1358, %v255
    %v1361 = vadd.f32 %v1359, 1e-05
    %v1362 = vadd.f32 %v1360, 1e-05
    %v1363 = vrsqrt.pop %v1361
    %v1364 = vmul.f32 %v1363, %v1361
    %v1365 = vmul.f32 %v1364, %v1363
    %v1366 = vmul.f32 0.5, %v1365
    %v1367 = vsub.f32 1.5, %v1366
    %v1368 = vmul.f32 %v1363, %v1367
    %vm1369 = vweird.f32 %v1361
    %vm1370 = vweird.f32 %v1363
    %vm1371 = vmor %vm1369, %vm1370
    %v1372 = vsel %vm1371, %v1363, %v1368
    %v1373 = vrsqrt.pop %v1362
    %v1374 = vmul.f32 %v1373, %v1362
    %v1375 = vmul.f32 %v1374, %v1373
    %v1376 = vmul.f32 0.5, %v1375
    %v1377 = vsub.f32 1.5, %v1376
    %v1378 = vmul.f32 %v1373, %v1377
    %vm1379 = vweird.f32 %v1362
    %vm1380 = vweird.f32 %v1373
    %vm1381 = vmor %vm1379, %vm1380
    %v1382 = vsel %vm1381, %v1373, %v1378
    %v1383 = vmul.f32 %v1349, %v1372
    %v1384 = vmul.f32 %v1350, %v1382
    %v1385 = vperm.slane %v993, 2
    %v1386 = vmul.f32 %v1383, %v1385
    %v1387 = vmul.f32 %v1384, %v1385
    %v1388 = vperm.slane %v993, 3
    %v1389 = vadd.f32 %v1386, %v1388
    %v1390 = vadd.f32 %v1387, %v1388
    %s1391 = scalar_lea.vmem %s13, 32
    %v1392 = vld [vmem:[%s1391] sm:$0xff]
    %v1393 = vld [vmem:[%s1391 + $0x8] sm:$0xff]
    %v1394 = vld [vmem:[%s1391 + $0x10] sm:$0xff]
    %v1395 = vld [vmem:[%s1391 + $0x18] sm:$0xff]
    %s1396 = scalar_lea.vmem %s14, 1
    %v1397 = vld [vmem:[%s1396] sm:$0x1]
    %v1399 = vperm.slane %v1397, 0
    %v1402 = vsel %vm245, %v1389, 0
    %v1405 = vsel %vm245, %v1390, 0
    %1407 = vmatpush.msra.mxu0 0.0
    %1408 = vmatpush.msra.mxu0 0.0
    %1409 = vmatpush.msra.mxu0 0.0
    %1410 = vmatpush.msra.mxu0 0.0
    %1411 = vmatpush.msra.mxu0 0.0
    %1412 = vmatpush.msra.mxu0 0.0
    %1413 = vmatpush.msra.mxu0 0.0
    %1414 = vmatpush.msra.mxu0 0.0
    %1415 = vmatpush.msra.mxu0 0.0
    %1416 = vmatpush.msra.mxu0 0.0
    %1417 = vmatpush.msra.mxu0 0.0
    %1418 = vmatpush.msra.mxu0 0.0
    %1419 = vmatpush.msra.mxu0 %v1395
    %1420 = vmatpush.msra.mxu0 %v1394
    %1421 = vmatpush.msra.mxu0 %v1393
    %1422 = vmatpush.msra.mxu0 %v1392
    %1423 = vmatmul.f32.gmra.mxu0 %v1402
    %v1424 = vpop.f32.mrf.mxu0
    %v1425 = vadd.f32 %v1399, %v1424
    %1426 = vmatmul.f32.gmra.mxu0 %v1405
    %v1427 = vpop.f32.mrf.mxu0
    %v1428 = vadd.f32 %v1399, %v1427
    %1429 = vdwg.mxu0
    %v1430 = vmul.f32 %v1425, 0.5
    %v1431 = vmul.f32 %v1428, 0.5
    %v1432 = vmul.f32 %v1425, 0.70710677
    %v1433 = vmul.f32 %v1428, 0.70710677
    %v1434 = vand.u32 2147483647, %v1432
    %v1435 = vand.u32 2147483647, %v1433
    %v1436 = vmul.f32 %v1434, 0.3275911
    %v1437 = vmul.f32 %v1435, 0.3275911
    %v1438 = vadd.f32 %v1436, 1.0
    %v1439 = vadd.f32 %v1437, 1.0
    %v1440 = vrcp.pop %v1438
    %v1441 = vmul.f32 %v1438, %v1440
    %v1442 = vsub.f32 1.0, %v1441
    %v1443 = vmul.f32 %v1440, %v1442
    %v1444 = vadd.f32 %v1440, %v1443
    %vm1445 = vweird.f32 %v1438
    %vm1446 = vweird.f32 %v1440
    %vm1447 = vmor %vm1445, %vm1446
    %v1448 = vsel %vm1447, %v1440, %v1444
    %v1449 = vand.u32 2147483647, %v1438
    %vm1450 = vcmp.eq.f32.partialorder %v1449, 8.507059e+37
    %v1451 = vand.u32 %v1438, 2147483648
    %v1452 = vor.u32 1.1754944e-38, %v1451
    %v1453 = vsel %vm1450, %v1452, %v1448
    %v1454 = vmul.f32 1.0, %v1453
    %v1455 = vrcp.pop %v1439
    %v1456 = vmul.f32 %v1439, %v1455
    %v1457 = vsub.f32 1.0, %v1456
    %v1458 = vmul.f32 %v1455, %v1457
    %v1459 = vadd.f32 %v1455, %v1458
    %vm1460 = vweird.f32 %v1439
    %vm1461 = vweird.f32 %v1455
    %vm1462 = vmor %vm1460, %vm1461
    %v1463 = vsel %vm1462, %v1455, %v1459
    %v1464 = vand.u32 2147483647, %v1439
    %vm1465 = vcmp.eq.f32.partialorder %v1464, 8.507059e+37
    %v1466 = vand.u32 %v1439, 2147483648
    %v1467 = vor.u32 1.1754944e-38, %v1466
    %v1468 = vsel %vm1465, %v1467, %v1463
    %v1469 = vmul.f32 1.0, %v1468
    %v1470 = vmul.f32 %v1454, 1.0614054
    %v1471 = vmul.f32 %v1469, 1.0614054
    %v1472 = vadd.f32 %v1470, -1.4531521
    %v1473 = vadd.f32 %v1471, -1.4531521
    %v1474 = vmul.f32 %v1472, %v1454
    %v1475 = vmul.f32 %v1473, %v1469
    %v1476 = vadd.f32 %v1474, 1.4214138
    %v1477 = vadd.f32 %v1475, 1.4214138
    %v1478 = vmul.f32 %v1476, %v1454
    %v1479 = vmul.f32 %v1477, %v1469
    %v1480 = vadd.f32 %v1478, -0.28449672
    %v1481 = vadd.f32 %v1479, -0.28449672
    %v1482 = vmul.f32 %v1480, %v1454
    %v1483 = vmul.f32 %v1481, %v1469
    %v1484 = vadd.f32 %v1482, 0.2548296
    %v1485 = vadd.f32 %v1483, 0.2548296
    %v1486 = vmul.f32 %v1484, %v1454
    %v1487 = vmul.f32 %v1485, %v1469
    %v1488 = vsub.f32 0.0, %v1434
    %v1489 = vsub.f32 0.0, %v1435
    %v1490 = vmul.f32 %v1488, %v1434
    %v1491 = vmul.f32 %v1489, %v1435
    %v1492 = vmul.f32 %v1490, 1.442695
    %v1493 = vpow.pop %v1492
    %v1494 = vmul.f32 %v1491, 1.442695
    %v1495 = vpow.pop %v1494
    %v1496 = vmul.f32 %v1486, %v1493
    %v1497 = vmul.f32 %v1487, %v1495
    %v1498 = vsub.f32 1.0, %v1496
    %v1499 = vsub.f32 1.0, %v1497
    %vm1500 = vcmp.ge.f32.partialorder %v1432, 0.0
    %vm1501 = vcmp.ge.f32.partialorder %v1433, 0.0
    %v1502 = vsub.f32 0.0, %v1498
    %v1503 = vsub.f32 0.0, %v1499
    %v1504 = vsel %vm1500, %v1498, %v1502
    %v1505 = vsel %vm1501, %v1499, %v1503
    %v1506 = vadd.f32 %v1504, 1.0
    %v1507 = vadd.f32 %v1505, 1.0
    %v1508 = vmul.f32 %v1430, %v1506
    %v1509 = vmul.f32 %v1431, %v1507
    %s1510 = scalar_lea.vmem %s15, 64
    %v1511 = vld [vmem:[%s1510] sm:$0xff]
    %v1512 = vld [vmem:[%s1510 + $0x8] sm:$0xff]
    %v1513 = vld [vmem:[%s1510 + $0x10] sm:$0xff]
    %v1514 = vld [vmem:[%s1510 + $0x18] sm:$0xff]
    %v1515 = vld [vmem:[%s1510 + $0x20] sm:$0xff]
    %v1516 = vld [vmem:[%s1510 + $0x28] sm:$0xff]
    %v1517 = vld [vmem:[%s1510 + $0x30] sm:$0xff]
    %v1518 = vld [vmem:[%s1510 + $0x38] sm:$0xff]
    %s1519 = scalar_lea.vmem %s16, 1
    %v1520 = vld [vmem:[%s1519] sm:$0x1]
    %v1522 = vperm.slane %v1520, 0
    %v1525 = vsel %vm307, %v1508, 0
    %v1528 = vsel %vm307, %v1509, 0
    %1530 = vmatpush.msra.mxu0 0.0
    %1531 = vmatpush.msra.mxu0 0.0
    %1532 = vmatpush.msra.mxu0 0.0
    %1533 = vmatpush.msra.mxu0 0.0
    %1534 = vmatpush.msra.mxu0 0.0
    %1535 = vmatpush.msra.mxu0 0.0
    %1536 = vmatpush.msra.mxu0 0.0
    %1537 = vmatpush.msra.mxu0 0.0
    %1538 = vmatpush.msra.mxu0 %v1518
    %1539 = vmatpush.msra.mxu0 %v1517
    %1540 = vmatpush.msra.mxu0 %v1516
    %1541 = vmatpush.msra.mxu0 %v1515
    %1542 = vmatpush.msra.mxu0 %v1514
    %1543 = vmatpush.msra.mxu0 %v1513
    %1544 = vmatpush.msra.mxu0 %v1512
    %1545 = vmatpush.msra.mxu0 %v1511
    %1546 = vmatmul.f32.gmra.mxu0 %v1525
    %v1547 = vpop.f32.mrf.mxu0
    %v1548 = vadd.f32 %v1522, %v1547
    %1549 = vmatmul.f32.gmra.mxu0 %v1528
    %v1550 = vpop.f32.mrf.mxu0
    %v1551 = vadd.f32 %v1522, %v1550
    %1552 = vdwg.mxu0
    %v1553 = vadd.f32 %v1548, %v1339
    %v1554 = vadd.f32 %v1551, %v1340
    %v1555 = vld [vmem:[%s17] sm:$0x1]
    %v1556 = vld [vmem:[%s17 + $0x1] sm:$0x1]
    %v1557 = vsel %vm245, %v1553, 0.0
    %1558 = vadd.xlane.f32.xlu0 %v1557
    %v1559 = vpop.xlane.xlu0 %1558
    %v1560 = vsel %vm245, %v1554, 0.0
    %1561 = vadd.xlane.f32.xlu0 %v1560
    %v1562 = vpop.xlane.xlu0 %1561
    %v1563 = vmul.f32 %v1559, %v255
    %v1564 = vmul.f32 %v1562, %v255
    %v1565 = vsub.f32 %v1553, %v1563
    %v1566 = vsub.f32 %v1554, %v1564
    %v1567 = vmul.f32 %v1565, %v1565
    %v1568 = vmul.f32 %v1566, %v1566
    %v1569 = vsel %vm245, %v1567, 0.0
    %1570 = vadd.xlane.f32.xlu0 %v1569
    %v1571 = vpop.xlane.xlu0 %1570
    %v1572 = vsel %vm245, %v1568, 0.0
    %1573 = vadd.xlane.f32.xlu0 %v1572
    %v1574 = vpop.xlane.xlu0 %1573
    %v1575 = vmul.f32 %v1571, %v255
    %v1576 = vmul.f32 %v1574, %v255
    %v1577 = vadd.f32 %v1575, 1e-05
    %v1578 = vadd.f32 %v1576, 1e-05
    %v1579 = vrsqrt.pop %v1577
    %v1580 = vmul.f32 %v1579, %v1577
    %v1581 = vmul.f32 %v1580, %v1579
    %v1582 = vmul.f32 0.5, %v1581
    %v1583 = vsub.f32 1.5, %v1582
    %v1584 = vmul.f32 %v1579, %v1583
    %vm1585 = vweird.f32 %v1577
    %vm1586 = vweird.f32 %v1579
    %vm1587 = vmor %vm1585, %vm1586
    %v1588 = vsel %vm1587, %v1579, %v1584
    %v1589 = vrsqrt.pop %v1578
    %v1590 = vmul.f32 %v1589, %v1578
    %v1591 = vmul.f32 %v1590, %v1589
    %v1592 = vmul.f32 0.5, %v1591
    %v1593 = vsub.f32 1.5, %v1592
    %v1594 = vmul.f32 %v1589, %v1593
    %vm1595 = vweird.f32 %v1578
    %vm1596 = vweird.f32 %v1589
    %vm1597 = vmor %vm1595, %vm1596
    %v1598 = vsel %vm1597, %v1589, %v1594
    %v1599 = vmul.f32 %v1565, %v1588
    %v1600 = vmul.f32 %v1566, %v1598
    %v1601 = vperm.slane %v1555, 0
    %v1602 = vmul.f32 %v1599, %v1601
    %v1603 = vmul.f32 %v1600, %v1601
    %v1604 = vperm.slane %v1556, 0
    %v1605 = vadd.f32 %v1602, %v1604
    %v1606 = vadd.f32 %v1603, %v1604
    %v1607 = vld [vmem:[%s18] sm:$0x3]
    %v1609 = vsel %vm529, %v1607, 0
    %1611 = vmatpush.msra.mxu0 0.0
    %1612 = vmatpush.msra.mxu0 0.0
    %1613 = vmatpush.msra.mxu0 0.0
    %1614 = vmatpush.msra.mxu0 0.0
    %1615 = vmatpush.msra.mxu0 0.0
    %1616 = vmatpush.msra.mxu0 0.0
    %1617 = vmatpush.msra.mxu0 0.0
    %1618 = vmatpush.msra.mxu0 0.0
    %1619 = vmatpush.msra.mxu0 0.0
    %1620 = vmatpush.msra.mxu0 0.0
    %1621 = vmatpush.msra.mxu0 0.0
    %1622 = vmatpush.msra.mxu0 0.0
    %1623 = vmatpush.msra.mxu0 0.0
    %1624 = vmatpush.msra.mxu0 0.0
    %1625 = vmatpush.msra.mxu0 %v1606
    %1626 = vmatpush.msra.mxu0 %v1605
    %1627 = vmatmul.f32.gmra.mxu0 %v1609
    %v1628 = vpop.f32.mrf.mxu0
    %v1629 = vadd.f32 0.0, %v1628
    %1630 = vdwg.mxu0
    %v1631 = vld [vmem:[%s19] sm:$0xff]
    %v1632 = vld [vmem:[%s19 + $0x8] sm:$0xff]
    %v1633 = vld [vmem:[%s19 + $0x10] sm:$0xff]
    %v1634 = vld [vmem:[%s19 + $0x18] sm:$0xff]
    %v1635 = vld [vmem:[%s20] sm:$0x1]
    %v1637 = vperm.slane %v1635, 0
    %v1640 = vsel %vm245, %v1629, 0
    %1642 = vmatpush.msra.mxu0 0.0
    %1643 = vmatpush.msra.mxu0 0.0
    %1644 = vmatpush.msra.mxu0 0.0
    %1645 = vmatpush.msra.mxu0 0.0
    %1646 = vmatpush.msra.mxu0 0.0
    %1647 = vmatpush.msra.mxu0 0.0
    %1648 = vmatpush.msra.mxu0 0.0
    %1649 = vmatpush.msra.mxu0 0.0
    %1650 = vmatpush.msra.mxu0 0.0
    %1651 = vmatpush.msra.mxu0 0.0
    %1652 = vmatpush.msra.mxu0 0.0
    %1653 = vmatpush.msra.mxu0 0.0
    %1654 = vmatpush.msra.mxu0 %v1634
    %1655 = vmatpush.msra.mxu0 %v1633
    %1656 = vmatpush.msra.mxu0 %v1632
    %1657 = vmatpush.msra.mxu0 %v1631
    %1658 = vmatmul.f32.gmra.mxu0 %v1640
    %v1659 = vpop.f32.mrf.mxu0
    %v1660 = vadd.f32 %v1637, %v1659
    %1661 = vdwg.mxu0
    %vm1662 = vcmask 74752
    %1663 = vst.msk [vmem:[#allocation2] sm:$0x3] %vm1662, %v1660
    // Predicated region
    $region86: #{simple_vit_forward.1} parent=1 // pred_check
      _
    $region87: #{simple_vit_forward.1} parent=1 // pred_check_branch
      %1665 = sbr.rel (0) target = $region89
    $region88: #{simple_vit_forward.1} parent=1 // pred_region
      %1667 = vsyncadd [#allocation3], 0
      %s1669 = sshll.u32 [#allocation2], 4
      %s1670 = int_to_ptr.vmem [resolvable:$true] %s1669
      %s1671 = sshll.u32 %s21, 4
      %s1672 = int_to_ptr.hbm [resolvable:$true] %s1671
      %1674 = dma.vmem_to_hbm [thread:$0]  %s1670, 32, %s1672, [#allocation3]
    $region89: #{simple_vit_forward.1} parent=1 // pred_fallthru
      _
    // Predicated region
    $region90: #{simple_vit_forward.1} parent=1 // pred_check
      _
    $region91: #{simple_vit_forward.1} parent=1 // pred_check_branch
      %1676 = sbr.rel (0) target = $region93
    $region92: #{simple_vit_forward.1} parent=1 // pred_region
      %1678 = dma.done [#allocation3], 32
    $region93: #{simple_vit_forward.1} parent=1 // pred_fallthru
      _
    %1679 = vsyncpa [#allocation3], 1

</llo_original>
